<compile_context>
chip_gen: v5e
topology: v5e:2x2
jax: 0.10.0
libtpu: 0.0.40
codegen_flags: <defaults>
</compile_context>

<pallas_src>
import math
from functools import partial

import numpy as np
import jax
import jax.numpy as jnp
from jax.experimental import pallas as pl
from jax.experimental.pallas import tpu as pltpu


_OPERAND_DTYPE = jnp.bfloat16   # MXU-native operand dtype; accumulation is f32.


def _round_up(x, m):
    return ((x + m - 1) // m) * m


def _pick_tile(n, candidates):
    """Pick the tile size that minimises padding; ties go to the larger tile."""
    best_t, best_np = None, None
    for t in candidates:                     # largest first
        npad = _round_up(n, t)
        if best_np is None or npad < best_np:
            best_t, best_np = t, npad
    return best_t, best_np


def _pad_cast(x, shape, dtype):
    """Cast then zero-pad to `shape`; both are no-ops when already matching."""
    if x.dtype != dtype:
        x = x.astype(dtype)
    pads = [(0, t - s) for s, t in zip(x.shape, shape)]
    if any(p[1] for p in pads):
        x = jnp.pad(x, pads)
    return x


# ----------------------------------------------------------------------------
# Pallas kernel: tiled GEMM with an optional fused second contraction
# (short K2, consumed in the epilogue) + bias + ReLU.
# ----------------------------------------------------------------------------
def _gemm_kernel(*refs, relu, has_bias, has_ab2, single_k):
    a_ref, b_ref = refs[0], refs[1]
    idx = 2
    if has_ab2:
        a2_ref, b2_ref = refs[idx], refs[idx + 1]
        idx += 2
    if has_bias:
        bias_ref = refs[idx]
        idx += 1
    o_ref = refs[idx]
    acc_ref = None if single_k else refs[idx + 1]

    def dot_ab():
        return jnp.dot(a_ref[...], b_ref[...], preferred_element_type=jnp.float32)

    def epilogue(acc):
        if has_ab2:
            acc = acc + jnp.dot(a2_ref[...], b2_ref[...],
                                preferred_element_type=jnp.float32)
        if has_bias:
            acc = acc + bias_ref[...]          # (tm, 1) broadcast over lanes
        if relu:
            acc = jnp.maximum(acc, 0.0)
        o_ref[...] = acc.astype(o_ref.dtype)

    if single_k:
        # Single K step: no VMEM accumulator, write dot + epilogue directly.
        epilogue(dot_ab())
    else:
        k = pl.program_id(3)

        @pl.when(k == 0)
        def _():
            acc_ref[...] = dot_ab()            # direct assign: no zero-init pass

        @pl.when(k > 0)
        def _():
            acc_ref[...] += dot_ab()

        @pl.when(k == pl.num_programs(3) - 1)
        def _():
            epilogue(acc_ref[...])


def _map_a(batched):
    return (lambda bb, i, j, k: (bb, i, k)) if batched else \
           (lambda bb, i, j, k: (0, i, k))


def _map_b(batched):
    return (lambda bb, i, j, k: (bb, k, j)) if batched else \
           (lambda bb, i, j, k: (0, k, j))


def _map_a2(batched):
    return (lambda bb, i, j, k: (bb, i, 0)) if batched else \
           (lambda bb, i, j, k: (0, i, 0))


def _map_b2(batched):
    return (lambda bb, i, j, k: (bb, 0, j)) if batched else \
           (lambda bb, i, j, k: (0, 0, j))


def fused_matmul(a, b, *, a2=None, b2=None, bias=None, relu=False,
                 out_dtype=jnp.float32, operand_dtype=_OPERAND_DTYPE,
                 vmem_limit_bytes=32 * 1024 * 1024):
    """out[p] = [relu]( a[p?] @ b[p?] + a2[p?] @ b2[p?] + bias[:, None] ).

    All operands are 3-D with leading batch dim in {1, B}; dim-1 operands are
    shared across the batch (re-used via the index_map, never broadcast in
    HBM).  (a2, b2) form a second, single-block-K contraction fused into the
    epilogue of the main GEMM.  Returns (B, M, N) in out_dtype.
    """
    Ba, M, K = a.shape
    Bb, Kb, N = b.shape
    assert K == Kb, (a.shape, b.shape)
    B = max(Ba, Bb)
    has_ab2 = a2 is not None
    if has_ab2:
        Ba2, M2, K2 = a2.shape
        Bb2, K2b, N2 = b2.shape
        assert M2 == M and N2 == N and K2 == K2b, (a2.shape, b2.shape)
        B = max(B, Ba2, Bb2)
    has_bias = bias is not None
    for bdim in (Ba, Bb) + ((Ba2, Bb2) if has_ab2 else ()):
        assert bdim in (1, B)

    # ---- shape-adaptive tiles ----------------------------------------------
    if M <= 256:
        tm = _round_up(M, 16)
        Mp = tm
    else:
        tm = 256
        Mp = _round_up(M, tm)
    tn, Np = _pick_tile(N, (512, 384, 256, 128))   # minimise lane padding
    if K <= 1024:
        tk = _round_up(K, 128)                     # single k-step whenever possible
        Kp = tk
    else:
        tk = 512
        Kp = _round_up(K, tk)
    single_k = (Kp == tk)

    # ---- pad + cast operands (no-ops when already padded / bf16) -----------
    ap = _pad_cast(a, (Ba, Mp, Kp), operand_dtype)
    bp = _pad_cast(b, (Bb, Kp, Np), operand_dtype)
    args = [ap, bp]
    in_specs = [pl.BlockSpec((None, tm, tk), _map_a(Ba > 1)),
                pl.BlockSpec((None, tk, tn), _map_b(Bb > 1))]

    if has_ab2:
        K2p = _round_up(K2, 128)                   # whole K2 lives in one block
        a2p = _pad_cast(a2, (Ba2, Mp, K2p), operand_dtype)
        b2p = _pad_cast(b2, (Bb2, K2p, Np), operand_dtype)
        args += [a2p, b2p]
        in_specs += [pl.BlockSpec((None, tm, K2p), _map_a2(Ba2 > 1)),
                     pl.BlockSpec((None, K2p, tn), _map_b2(Bb2 > 1))]

    if has_bias:
        biasp = _pad_cast(bias.reshape(M, 1), (Mp, 1), jnp.float32)
        args.append(biasp)
        in_specs.append(pl.BlockSpec((tm, 1), lambda bb, i, j, k: (i, 0)))

    scratch = [] if single_k else [pltpu.VMEM((tm, tn), jnp.float32)]

    out = pl.pallas_call(
        partial(_gemm_kernel, relu=relu, has_bias=has_bias,
                has_ab2=has_ab2, single_k=single_k),
        out_shape=jax.ShapeDtypeStruct((B, Mp, Np), out_dtype),
        grid_spec=pltpu.PrefetchScalarGridSpec(
            num_scalar_prefetch=0,
            grid=(B, Mp // tm, Np // tn, Kp // tk),
            in_specs=in_specs,
            out_specs=pl.BlockSpec((None, tm, tn),
                                   lambda bb, i, j, k: (bb, i, j)),
            scratch_shapes=scratch,
        ),
        compiler_params=pltpu.CompilerParams(
            dimension_semantics=("parallel", "parallel", "parallel",
                                 "arbitrary"),
            vmem_limit_bytes=vmem_limit_bytes,
        ),
    )(*args)
    return out[:, :M, :N]


# ----------------------------------------------------------------------------
# Static pooling / interpolation operators (host-side, trace-time constants)
# ----------------------------------------------------------------------------
def _adaptive_avg_pool_matrix(in_size, out_size):
    """M (out, in) s.t. pooled = M @ x matches nn.AdaptiveAvgPool semantics."""
    m = np.zeros((out_size, in_size), np.float32)
    for i in range(out_size):
        lo = (i * in_size) // out_size
        hi = -((-(i + 1) * in_size) // out_size)      # ceil division
        m[i, lo:hi] = 1.0 / (hi - lo)
    return m


def _bilinear_upsample_matrix(in_size, out_size):
    """U (out, in) for 1-D bilinear interpolation, align_corners=False."""
    u = np.zeros((out_size, in_size), np.float32)
    scale = in_size / out_size
    for y in range(out_size):
        src = max((y + 0.5) * scale - 0.5, 0.0)
        i0 = min(int(np.floor(src)), in_size - 1)
        i1 = min(i0 + 1, in_size - 1)
        frac = src - i0
        u[y, i0] += 1.0 - frac
        u[y, i1] += frac
    return u


def _psp_operators(H, W, sizes, Pp):
    """pool_t (H*W, Pp): x_flat @ pool_t = all adaptive average pools, stages
    concatenated (zero-padded to Pp lanes).  up_t (Pp, H*W): z @ up_t = sum
    over stages of the bilinear upsample of each stage back to (H, W)."""
    pool_rows, up_cols = [], []
    for s in sizes:
        ph = _adaptive_avg_pool_matrix(H, s)          # (s, H)
        pw = _adaptive_avg_pool_matrix(W, s)          # (s, W)
        pool_rows.append(np.kron(ph, pw))             # (s*s, H*W)
        uh = _bilinear_upsample_matrix(s, H)          # (H, s)
        uw = _bilinear_upsample_matrix(s, W)          # (W, s)
        up_cols.append(np.kron(uh, uw))               # (H*W, s*s)
    P = sum(s * s for s in sizes)
    pool_t = np.zeros((H * W, Pp), np.float32)
    pool_t[:, :P] = np.concatenate(pool_rows, axis=0).T
    up_t = np.zeros((Pp, H * W), np.float32)
    up_t[:P, :] = np.concatenate(up_cols, axis=1).T
    return (jnp.asarray(pool_t, dtype=_OPERAND_DTYPE),
            jnp.asarray(up_t, dtype=_OPERAND_DTYPE))


# ----------------------------------------------------------------------------
# PSPModule forward
# ----------------------------------------------------------------------------
def psp_forward(params, feats, *, sizes=(2, 3, 6, 14)):
    """feats: (B, C, H, W) NCHW.  Returns (B, out_features, H, W) float32."""
    B, C, H, W = feats.shape
    HW = H * W
    n_stage = len(sizes)
    P = sum(s * s for s in sizes)
    Pp = _round_up(P, 128)

    wb = params["bottleneck_w"]
    out_f = wb.shape[0]
    wb = wb.reshape(out_f, (n_stage + 1) * C)         # 1x1 conv == matrix
    bias = params["bottleneck_b"]

    pool_t, up_t = _psp_operators(H, W, sizes, Pp)    # static bf16 constants

    # Hoisted bf16 cast of the feature map (used by the pooling GEMM and the
    # final fused GEMM).  NCHW is kept: channels on sublanes, spatial on lanes.
    x = feats.astype(_OPERAND_DTYPE).reshape(B, C, HW)

    # 1) All four adaptive average pools in ONE lane-dense GEMM.  The RHS is
    #    shared across the batch, so batch is flattened into M to fill the
    #    MXU rows and stream pool_t only once.
    pooled = fused_matmul(x.reshape(1, B * C, HW), pool_t[None],
                          out_dtype=_OPERAND_DTYPE)   # (1, B*C, Pp) bf16
    pooled = pooled.reshape(B, C, Pp)

    # 2) Fold every stage's bias-free 1x1 conv into its slice of the
    #    bottleneck weight at trace time (G_s = wb_s @ ws_s), then compute all
    #    priors' bottleneck contributions zc with ONE batched GEMM over a
    #    block-diagonal arrangement of the pooled stages.
    g_blocks, rhs_rows, off = [], [], 0
    for si, s in enumerate(sizes):
        ws = params["stage_w"][si].reshape(C, C)
        g_blocks.append(jnp.dot(wb[:, si * C:(si + 1) * C], ws))   # (out_f, C)
        seg = pooled[:, :, off:off + s * s]                        # (B, C, s*s)
        rhs_rows.append(jnp.pad(seg, ((0, 0), (0, 0),
                                      (off, Pp - off - s * s))))
        off += s * s
    g_cat = jnp.concatenate(g_blocks, axis=1)         # (out_f, n_stage*C)
    pooled_bd = jnp.concatenate(rhs_rows, axis=1)     # (B, n_stage*C, Pp)
    zc = fused_matmul(g_cat[None], pooled_bd,
                      out_dtype=_OPERAND_DTYPE)       # (B, out_f, Pp) bf16

    # 3+4) K-fused final kernel: raw-feature bottleneck term (wb_f @ x) plus
    #    the bilinear upsample of every prior (zc @ up_t) plus bias and ReLU,
    #    all in one pallas_call.  The (B, out_f, H*W) prior sum never touches
    #    HBM and the 5*C channel concat is never materialised.
    wb_f = wb[:, n_stage * C:]                        # (out_f, C)
    out = fused_matmul(wb_f[None], x, a2=zc, b2=up_t[None],
                       bias=bias, relu=True,
                       out_dtype=jnp.float32)         # (B, out_f, H*W)
    return out.reshape(B, out_f, H, W)


# ----------------------------------------------------------------------------
# Parameter construction (shapes follow the PyTorch __init__)
# ----------------------------------------------------------------------------
def init_psp_params(key, features, out_features=1024, sizes=(2, 3, 6, 14)):
    n_stage = len(sizes)
    keys = jax.random.split(key, n_stage + 2)
    stage_w = [
        jax.random.normal(keys[i], (features, features, 1, 1), jnp.float32)
        / math.sqrt(features)
        for i in range(n_stage)
    ]
    cin = features * (n_stage + 1)
    bottleneck_w = jax.random.normal(keys[-2], (out_features, cin, 1, 1),
                                     jnp.float32) / math.sqrt(cin)
    bottleneck_b = 0.01 * jax.random.normal(keys[-1], (out_features,),
                                            jnp.float32)
    return {"stage_w": stage_w,
            "bottleneck_w": bottleneck_w,
            "bottleneck_b": bottleneck_b}


# ----------------------------------------------------------------------------
if __name__ == "__main__":
    key = jax.random.PRNGKey(0)
    k_x, k_p = jax.random.split(key)

    # Small shapes; sizes=(2, 3, 6, 14) needs H, W >= 14.
    B, C, H, W = 2, 64, 16, 16
    out_features = 128
    sizes = (2, 3, 6, 14)

    feats = jax.random.normal(k_x, (B, C, H, W), jnp.float32)
    params = init_psp_params(k_p, C, out_features, sizes)

    fwd = jax.jit(partial(psp_forward, sizes=sizes))
    out = jax.block_until_ready(fwd(params, feats))

    assert out.shape == (B, out_features, H, W), out.shape
    assert bool(jnp.all(jnp.isfinite(out)))
    assert bool(jnp.all(out >= 0.0))   # ReLU epilogue
    print("KERNEL_OK")
</pallas_src>

<mosaic_0001>
module attributes {stable_mosaic.version = 11 : i64} {
  func.func @_gemm_kernel(%arg0: i32, %arg1: i32, %arg2: i32, %arg3: i32, %arg4: memref<1x128x256xbf16, #tpu.memory_space<vmem>>, %arg5: memref<1x256x256xbf16, #tpu.memory_space<vmem>>, %arg6: memref<1x128x256xbf16, #tpu.memory_space<vmem>>) attributes {dimension_semantics = [#tpu.dimension_semantics<parallel>, #tpu.dimension_semantics<parallel>, #tpu.dimension_semantics<parallel>, #tpu.dimension_semantics<arbitrary>], iteration_bounds = array<i64: 1, 1, 1, 1>, scalar_prefetch = 0 : i64, scratch_operands = 0 : i64, tpu.core_type = #tpu.core_type<tc>, window_params = [{transform_indices = @transform_0, window_bounds = array<i64: 1, 128, 256>}, {transform_indices = @transform_1, window_bounds = array<i64: 1, 256, 256>}, {transform_indices = @transform_2, window_bounds = array<i64: 1, 128, 256>}]} {
    %c0 = arith.constant 0 : index
    %c0_0 = arith.constant 0 : index
    %c0_1 = arith.constant 0 : index
    %0 = vector.load %arg4[%c0, %c0_0, %c0_1] : memref<1x128x256xbf16, #tpu.memory_space<vmem>>, vector<1x128x256xbf16>
    %1 = vector.shape_cast %0 : vector<1x128x256xbf16> to vector<128x256xbf16>
    %c0_2 = arith.constant 0 : index
    %c0_3 = arith.constant 0 : index
    %c0_4 = arith.constant 0 : index
    %2 = vector.load %arg5[%c0_2, %c0_3, %c0_4] : memref<1x256x256xbf16, #tpu.memory_space<vmem>>, vector<1x256x256xbf16>
    %3 = vector.shape_cast %2 : vector<1x256x256xbf16> to vector<256x256xbf16>
    %cst = arith.constant dense<0.000000e+00> : vector<128x256xf32>
    %4 = tpu.matmul %1, %3, %cst {dimension_numbers = #tpu.dot_dimension_numbers<[1], [0], [0], [1], [0, 0, 1, 1], [], []>} : vector<128x256xbf16>, vector<256x256xbf16>, vector<128x256xf32> -> vector<128x256xf32>
    %5 = arith.truncf %4 : vector<128x256xf32> to vector<128x256xbf16>
    %c0_5 = arith.constant 0 : index
    %c0_6 = arith.constant 0 : index
    %c0_7 = arith.constant 0 : index
    %6 = vector.load %arg6[%c0_5, %c0_6, %c0_7] : memref<1x128x256xbf16, #tpu.memory_space<vmem>>, vector<1x128x256xbf16>
    %7 = vector.shape_cast %6 : vector<1x128x256xbf16> to vector<128x256xbf16>
    %8 = vector.shape_cast %5 : vector<128x256xbf16> to vector<1x128x256xbf16>
    tpu.vector_store %arg6[%c0_5, %c0_6, %c0_7], %8 {strides = array<i32>} : memref<1x128x256xbf16, #tpu.memory_space<vmem>>, vector<1x128x256xbf16>,
    return
  }
  func.func @transform_0(%arg0: i32, %arg1: i32, %arg2: i32, %arg3: i32) -> (i32, i32, i32) {
    %c0_i32 = arith.constant 0 : i32
    %c0_i32_0 = arith.constant 0 : i32
    return %c0_i32, %arg1, %arg3 : i32, i32, i32
  }
  func.func @transform_1(%arg0: i32, %arg1: i32, %arg2: i32, %arg3: i32) -> (i32, i32, i32) {
    %c0_i32 = arith.constant 0 : i32
    %c0_i32_0 = arith.constant 0 : i32
    return %c0_i32, %arg3, %arg2 : i32, i32, i32
  }
  func.func @transform_2(%arg0: i32, %arg1: i32, %arg2: i32, %arg3: i32) -> (i32, i32, i32) {
    %c0_i32 = arith.constant 0 : i32
    return %arg0, %arg1, %arg2 : i32, i32, i32
  }
}

module attributes {stable_mosaic.version = 11 : i64} {
  func.func @_gemm_kernel(%arg0: i32, %arg1: i32, %arg2: i32, %arg3: i32, %arg4: memref<1x128x256xbf16, #tpu.memory_space<vmem>>, %arg5: memref<1x256x256xbf16, #tpu.memory_space<vmem>>, %arg6: memref<1x128x256xbf16, #tpu.memory_space<vmem>>) attributes {dimension_semantics = [#tpu.dimension_semantics<parallel>, #tpu.dimension_semantics<parallel>, #tpu.dimension_semantics<parallel>, #tpu.dimension_semantics<arbitrary>], iteration_bounds = array<i64: 2, 1, 1, 1>, scalar_prefetch = 0 : i64, scratch_operands = 0 : i64, tpu.core_type = #tpu.core_type<tc>, window_params = [{transform_indices = @transform_0, window_bounds = array<i64: 1, 128, 256>}, {transform_indices = @transform_1, window_bounds = array<i64: 1, 256, 256>}, {transform_indices = @transform_2, window_bounds = array<i64: 1, 128, 256>}]} {
    %c0 = arith.constant 0 : index
    %c0_0 = arith.constant 0 : index
    %c0_1 = arith.constant 0 : index
    %0 = vector.load %arg4[%c0, %c0_0, %c0_1] : memref<1x128x256xbf16, #tpu.memory_space<vmem>>, vector<1x128x256xbf16>
    %1 = vector.shape_cast %0 : vector<1x128x256xbf16> to vector<128x256xbf16>
    %c0_2 = arith.constant 0 : index
    %c0_3 = arith.constant 0 : index
    %c0_4 = arith.constant 0 : index
    %2 = vector.load %arg5[%c0_2, %c0_3, %c0_4] : memref<1x256x256xbf16, #tpu.memory_space<vmem>>, vector<1x256x256xbf16>
    %3 = vector.shape_cast %2 : vector<1x256x256xbf16> to vector<256x256xbf16>
    %cst = arith.constant dense<0.000000e+00> : vector<128x256xf32>
    %4 = tpu.matmul %1, %3, %cst {dimension_numbers = #tpu.dot_dimension_numbers<[1], [0], [0], [1], [0, 0, 1, 1], [], []>} : vector<128x256xbf16>, vector<256x256xbf16>, vector<128x256xf32> -> vector<128x256xf32>
    %5 = arith.truncf %4 : vector<128x256xf32> to vector<128x256xbf16>
    %c0_5 = arith.constant 0 : index
    %c0_6 = arith.constant 0 : index
    %c0_7 = arith.constant 0 : index
    %6 = vector.load %arg6[%c0_5, %c0_6, %c0_7] : memref<1x128x256xbf16, #tpu.memory_space<vmem>>, vector<1x128x256xbf16>
    %7 = vector.shape_cast %6 : vector<1x128x256xbf16> to vector<128x256xbf16>
    %8 = vector.shape_cast %5 : vector<128x256xbf16> to vector<1x128x256xbf16>
    tpu.vector_store %arg6[%c0_5, %c0_6, %c0_7], %8 {strides = array<i32>} : memref<1x128x256xbf16, #tpu.memory_space<vmem>>, vector<1x128x256xbf16>,
    return
  }
  func.func @transform_0(%arg0: i32, %arg1: i32, %arg2: i32, %arg3: i32) -> (i32, i32, i32) {
    %c0_i32 = arith.constant 0 : i32
    %c0_i32_0 = arith.constant 0 : i32
    return %c0_i32, %arg1, %arg3 : i32, i32, i32
  }
  func.func @transform_1(%arg0: i32, %arg1: i32, %arg2: i32, %arg3: i32) -> (i32, i32, i32) {
    %c0_i32 = arith.constant 0 : i32
    return %arg0, %arg3, %arg2 : i32, i32, i32
  }
  func.func @transform_2(%arg0: i32, %arg1: i32, %arg2: i32, %arg3: i32) -> (i32, i32, i32) {
    %c0_i32 = arith.constant 0 : i32
    return %arg0, %arg1, %arg2 : i32, i32, i32
  }
}

module attributes {stable_mosaic.version = 11 : i64} {
  func.func @_gemm_kernel(%arg0: i32, %arg1: i32, %arg2: i32, %arg3: i32, %arg4: memref<1x128x128xbf16, #tpu.memory_space<vmem>>, %arg5: memref<1x128x256xbf16, #tpu.memory_space<vmem>>, %arg6: memref<1x128x256xbf16, #tpu.memory_space<vmem>>, %arg7: memref<1x256x256xbf16, #tpu.memory_space<vmem>>, %arg8: memref<128x1xf32, #tpu.memory_space<vmem>>, %arg9: memref<1x128x256xf32, #tpu.memory_space<vmem>>) attributes {dimension_semantics = [#tpu.dimension_semantics<parallel>, #tpu.dimension_semantics<parallel>, #tpu.dimension_semantics<parallel>, #tpu.dimension_semantics<arbitrary>], iteration_bounds = array<i64: 2, 1, 1, 1>, scalar_prefetch = 0 : i64, scratch_operands = 0 : i64, tpu.core_type = #tpu.core_type<tc>, window_params = [{transform_indices = @transform_0, window_bounds = array<i64: 1, 128, 128>}, {transform_indices = @transform_1, window_bounds = array<i64: 1, 128, 256>}, {transform_indices = @transform_2, window_bounds = array<i64: 1, 128, 256>}, {transform_indices = @transform_3, window_bounds = array<i64: 1, 256, 256>}, {transform_indices = @transform_4, window_bounds = array<i64: 128, 1>}, {transform_indices = @transform_5, window_bounds = array<i64: 1, 128, 256>}]} {
    %c0 = arith.constant 0 : index
    %c0_0 = arith.constant 0 : index
    %c0_1 = arith.constant 0 : index
    %0 = vector.load %arg4[%c0, %c0_0, %c0_1] : memref<1x128x128xbf16, #tpu.memory_space<vmem>>, vector<1x128x128xbf16>
    %1 = vector.shape_cast %0 : vector<1x128x128xbf16> to vector<128x128xbf16>
    %c0_2 = arith.constant 0 : index
    %c0_3 = arith.constant 0 : index
    %c0_4 = arith.constant 0 : index
    %2 = vector.load %arg5[%c0_2, %c0_3, %c0_4] : memref<1x128x256xbf16, #tpu.memory_space<vmem>>, vector<1x128x256xbf16>
    %3 = vector.shape_cast %2 : vector<1x128x256xbf16> to vector<128x256xbf16>
    %cst = arith.constant dense<0.000000e+00> : vector<128x256xf32>
    %4 = tpu.matmul %1, %3, %cst {dimension_numbers = #tpu.dot_dimension_numbers<[1], [0], [0], [1], [0, 0, 1, 1], [], []>} : vector<128x128xbf16>, vector<128x256xbf16>, vector<128x256xf32> -> vector<128x256xf32>
    %c0_5 = arith.constant 0 : index
    %c0_6 = arith.constant 0 : index
    %c0_7 = arith.constant 0 : index
    %5 = vector.load %arg6[%c0_5, %c0_6, %c0_7] : memref<1x128x256xbf16, #tpu.memory_space<vmem>>, vector<1x128x256xbf16>
    %6 = vector.shape_cast %5 : vector<1x128x256xbf16> to vector<128x256xbf16>
    %c0_8 = arith.constant 0 : index
    %c0_9 = arith.constant 0 : index
    %c0_10 = arith.constant 0 : index
    %7 = vector.load %arg7[%c0_8, %c0_9, %c0_10] : memref<1x256x256xbf16, #tpu.memory_space<vmem>>, vector<1x256x256xbf16>
    %8 = vector.shape_cast %7 : vector<1x256x256xbf16> to vector<256x256xbf16>
    %cst_11 = arith.constant dense<0.000000e+00> : vector<128x256xf32>
    %9 = tpu.matmul %6, %8, %cst_11 {dimension_numbers = #tpu.dot_dimension_numbers<[1], [0], [0], [1], [0, 0, 1, 1], [], []>} : vector<128x256xbf16>, vector<256x256xbf16>, vector<128x256xf32> -> vector<128x256xf32>
    %10 = arith.addf %4, %9 : vector<128x256xf32>
    %c0_12 = arith.constant 0 : index
    %c0_13 = arith.constant 0 : index
    %11 = vector.load %arg8[%c0_12, %c0_13] : memref<128x1xf32, #tpu.memory_space<vmem>>, vector<128x1xf32>
    %12 = vector.broadcast %11 : vector<128x1xf32> to vector<128x256xf32>
    %13 = arith.addf %10, %12 : vector<128x256xf32>
    %cst_14 = arith.constant 0.000000e+00 : f32
    %14 = vector.broadcast %cst_14 : f32 to vector<128x256xf32>
    %15 = arith.maximumf %13, %14 : vector<128x256xf32>
    %c0_15 = arith.constant 0 : index
    %c0_16 = arith.constant 0 : index
    %c0_17 = arith.constant 0 : index
    %16 = vector.load %arg9[%c0_15, %c0_16, %c0_17] : memref<1x128x256xf32, #tpu.memory_space<vmem>>, vector<1x128x256xf32>
    %17 = vector.shape_cast %16 : vector<1x128x256xf32> to vector<128x256xf32>
    %18 = vector.shape_cast %15 : vector<128x256xf32> to vector<1x128x256xf32>
    tpu.vector_store %arg9[%c0_15, %c0_16, %c0_17], %18 {strides = array<i32>} : memref<1x128x256xf32, #tpu.memory_space<vmem>>, vector<1x128x256xf32>,
    return
  }
  func.func @transform_0(%arg0: i32, %arg1: i32, %arg2: i32, %arg3: i32) -> (i32, i32, i32) {
    %c0_i32 = arith.constant 0 : i32
    %c0_i32_0 = arith.constant 0 : i32
    return %c0_i32, %arg1, %arg3 : i32, i32, i32
  }
  func.func @transform_1(%arg0: i32, %arg1: i32, %arg2: i32, %arg3: i32) -> (i32, i32, i32) {
    %c0_i32 = arith.constant 0 : i32
    return %arg0, %arg3, %arg2 : i32, i32, i32
  }
  func.func @transform_2(%arg0: i32, %arg1: i32, %arg2: i32, %arg3: i32) -> (i32, i32, i32) {
    %c0_i32 = arith.constant 0 : i32
    %c0_i32_0 = arith.constant 0 : i32
    return %arg0, %arg1, %c0_i32 : i32, i32, i32
  }
  func.func @transform_3(%arg0: i32, %arg1: i32, %arg2: i32, %arg3: i32) -> (i32, i32, i32) {
    %c0_i32 = arith.constant 0 : i32
    %c0_i32_0 = arith.constant 0 : i32
    %c0_i32_1 = arith.constant 0 : i32
    return %c0_i32, %c0_i32_0, %arg2 : i32, i32, i32
  }
  func.func @transform_4(%arg0: i32, %arg1: i32, %arg2: i32, %arg3: i32) -> (i32, i32) {
    %c0_i32 = arith.constant 0 : i32
    %c0_i32_0 = arith.constant 0 : i32
    return %arg1, %c0_i32 : i32, i32
  }
  func.func @transform_5(%arg0: i32, %arg1: i32, %arg2: i32, %arg3: i32) -> (i32, i32, i32) {
    %c0_i32 = arith.constant 0 : i32
    return %arg0, %arg1, %arg2 : i32, i32, i32
  }
}

</mosaic_0001>

<llo_original>
// kernel: psp_forward.3
$region0: #{psp_forward.3}
  #allocation0 [shape = 'u32[]', space=smem, size = 0x4, offset = 0x4, fixed_abs, tag = 'smem constant byte address 0x4 - core index']
  #allocation1 [shape = 'u32[72,128]{1,0:T(1,128)}', space=vmem, size = 0x9000, scoped, tag = 'internal scratch']
  %s0 = inlined_call_operand.vmem [shape: bf16[1,128,256], index: 0, kind: input, shape index: {}]
  %s1 = inlined_call_operand.vmem [shape: bf16[1,256,256], index: 1, kind: input, shape index: {}]
  %s2 = inlined_call_operand.vmem [shape: bf16[1,128,256], index: 2, kind: output, shape index: {}]
  %s3 = sld [smem:[#allocation0]]
  $region18: #{psp_forward.3} parent=0
    _
  %s5 = ssub.s32 1, %s3
  %s6 = scalar_select 0, %s5, %s3
  // Predicated region
  $region2: #{psp_forward.3} parent=0 // pred_check
    _
  $region3: #{psp_forward.3} parent=0 // pred_check_branch
    %8 = sbr.rel (0) target = $region5
  $region4: #{psp_forward.3} parent=0 // pred_region
    _
  $region5: #{psp_forward.3} parent=0 // pred_fallthru
    _
  // Predicated region
  $region6: #{psp_forward.3} parent=0 // pred_check
    _
  $region7: #{psp_forward.3} parent=0 // pred_check_branch
    %10 = sbr.rel (0) target = $region9
  $region8: #{psp_forward.3} parent=0 // pred_region
    _
  $region9: #{psp_forward.3} parent=0 // pred_fallthru
    _
  %v11 = vld [vmem:[%s0] sm:$0xff]
  %v12 = vld [vmem:[%s0 + $0x8] sm:$0xff]
  %v13 = vld [vmem:[%s0 + $0x10] sm:$0xff]
  %v14 = vld [vmem:[%s0 + $0x18] sm:$0xff]
  %v15 = vld [vmem:[%s0 + $0x20] sm:$0xff]
  %v16 = vld [vmem:[%s0 + $0x28] sm:$0xff]
  %v17 = vld [vmem:[%s0 + $0x30] sm:$0xff]
  %v18 = vld [vmem:[%s0 + $0x38] sm:$0xff]
  %v19 = vld [vmem:[%s0 + $0x40] sm:$0xff]
  %v20 = vld [vmem:[%s0 + $0x48] sm:$0xff]
  %v21 = vld [vmem:[%s0 + $0x50] sm:$0xff]
  %v22 = vld [vmem:[%s0 + $0x58] sm:$0xff]
  %v23 = vld [vmem:[%s0 + $0x60] sm:$0xff]
  %v24 = vld [vmem:[%s0 + $0x68] sm:$0xff]
  %v25 = vld [vmem:[%s0 + $0x70] sm:$0xff]
  %v26 = vld [vmem:[%s0 + $0x78] sm:$0xff]
  %v27 = vld [vmem:[%s1] sm:$0xff]
  %v28 = vld [vmem:[%s1 + $0x8] sm:$0xff]
  %v29 = vld [vmem:[%s1 + $0x10] sm:$0xff]
  %v30 = vld [vmem:[%s1 + $0x18] sm:$0xff]
  %v31 = vld [vmem:[%s1 + $0x20] sm:$0xff]
  %v32 = vld [vmem:[%s1 + $0x28] sm:$0xff]
  %v33 = vld [vmem:[%s1 + $0x30] sm:$0xff]
  %v34 = vld [vmem:[%s1 + $0x38] sm:$0xff]
  %v35 = vld [vmem:[%s1 + $0x40] sm:$0xff]
  %v36 = vld [vmem:[%s1 + $0x48] sm:$0xff]
  %v37 = vld [vmem:[%s1 + $0x50] sm:$0xff]
  %v38 = vld [vmem:[%s1 + $0x58] sm:$0xff]
  %v39 = vld [vmem:[%s1 + $0x60] sm:$0xff]
  %v40 = vld [vmem:[%s1 + $0x68] sm:$0xff]
  %v41 = vld [vmem:[%s1 + $0x70] sm:$0xff]
  %v42 = vld [vmem:[%s1 + $0x78] sm:$0xff]
  %v43 = vld [vmem:[%s1 + $0x80] sm:$0xff]
  %v44 = vld [vmem:[%s1 + $0x88] sm:$0xff]
  %v45 = vld [vmem:[%s1 + $0x90] sm:$0xff]
  %v46 = vld [vmem:[%s1 + $0x98] sm:$0xff]
  %v47 = vld [vmem:[%s1 + $0xa0] sm:$0xff]
  %v48 = vld [vmem:[%s1 + $0xa8] sm:$0xff]
  %v49 = vld [vmem:[%s1 + $0xb0] sm:$0xff]
  %v50 = vld [vmem:[%s1 + $0xb8] sm:$0xff]
  %v51 = vld [vmem:[%s1 + $0xc0] sm:$0xff]
  %v52 = vld [vmem:[%s1 + $0xc8] sm:$0xff]
  %v53 = vld [vmem:[%s1 + $0xd0] sm:$0xff]
  %v54 = vld [vmem:[%s1 + $0xd8] sm:$0xff]
  %v55 = vld [vmem:[%s1 + $0xe0] sm:$0xff]
  %v56 = vld [vmem:[%s1 + $0xe8] sm:$0xff]
  %v57 = vld [vmem:[%s1 + $0xf0] sm:$0xff]
  %v58 = vld [vmem:[%s1 + $0xf8] sm:$0xff]
  %v75 = vunpack.c.l.b16 %v11
  %v76 = vunpack.c.h.b16 %v11
  %v77 = vunpack.c.l.b16 %v12
  %v78 = vunpack.c.h.b16 %v12
  %v79 = vunpack.c.l.b16 %v13
  %v80 = vunpack.c.h.b16 %v13
  %v81 = vunpack.c.l.b16 %v14
  %v82 = vunpack.c.h.b16 %v14
  %v83 = vunpack.c.l.b16 %v15
  %v84 = vunpack.c.h.b16 %v15
  %v85 = vunpack.c.l.b16 %v16
  %v86 = vunpack.c.h.b16 %v16
  %v87 = vunpack.c.l.b16 %v17
  %v88 = vunpack.c.h.b16 %v17
  %v89 = vunpack.c.l.b16 %v18
  %v90 = vunpack.c.h.b16 %v18
  %v91 = vunpack.c.l.b16 %v19
  %v92 = vunpack.c.h.b16 %v19
  %v93 = vunpack.c.l.b16 %v20
  %v94 = vunpack.c.h.b16 %v20
  %v95 = vunpack.c.l.b16 %v21
  %v96 = vunpack.c.h.b16 %v21
  %v97 = vunpack.c.l.b16 %v22
  %v98 = vunpack.c.h.b16 %v22
  %v99 = vunpack.c.l.b16 %v23
  %v100 = vunpack.c.h.b16 %v23
  %v101 = vunpack.c.l.b16 %v24
  %v102 = vunpack.c.h.b16 %v24
  %v103 = vunpack.c.l.b16 %v25
  %v104 = vunpack.c.h.b16 %v25
  %v105 = vunpack.c.l.b16 %v26
  %v106 = vunpack.c.h.b16 %v26
  %v107 = vpack.c.b16 %v77, %v75
  %v108 = vpack.c.b16 %v78, %v76
  %v109 = vpack.c.b16 %v81, %v79
  %v110 = vpack.c.b16 %v82, %v80
  %v111 = vpack.c.b16 %v85, %v83
  %v112 = vpack.c.b16 %v86, %v84
  %v113 = vpack.c.b16 %v89, %v87
  %v114 = vpack.c.b16 %v90, %v88
  %v115 = vpack.c.b16 %v93, %v91
  %v116 = vpack.c.b16 %v94, %v92
  %v117 = vpack.c.b16 %v97, %v95
  %v118 = vpack.c.b16 %v98, %v96
  %v119 = vpack.c.b16 %v101, %v99
  %v120 = vpack.c.b16 %v102, %v100
  %v121 = vpack.c.b16 %v105, %v103
  %v122 = vpack.c.b16 %v106, %v104
  %v171 = vunpack.c.l.b16 %v27
  %v172 = vunpack.c.h.b16 %v27
  %v173 = vunpack.c.l.b16 %v28
  %v174 = vunpack.c.h.b16 %v28
  %v175 = vunpack.c.l.b16 %v29
  %v176 = vunpack.c.h.b16 %v29
  %v177 = vunpack.c.l.b16 %v30
  %v178 = vunpack.c.h.b16 %v30
  %v179 = vunpack.c.l.b16 %v31
  %v180 = vunpack.c.h.b16 %v31
  %v181 = vunpack.c.l.b16 %v32
  %v182 = vunpack.c.h.b16 %v32
  %v183 = vunpack.c.l.b16 %v33
  %v184 = vunpack.c.h.b16 %v33
  %v185 = vunpack.c.l.b16 %v34
  %v186 = vunpack.c.h.b16 %v34
  %v187 = vunpack.c.l.b16 %v35
  %v188 = vunpack.c.h.b16 %v35
  %v189 = vunpack.c.l.b16 %v36
  %v190 = vunpack.c.h.b16 %v36
  %v191 = vunpack.c.l.b16 %v37
  %v192 = vunpack.c.h.b16 %v37
  %v193 = vunpack.c.l.b16 %v38
  %v194 = vunpack.c.h.b16 %v38
  %v195 = vunpack.c.l.b16 %v39
  %v196 = vunpack.c.h.b16 %v39
  %v197 = vunpack.c.l.b16 %v40
  %v198 = vunpack.c.h.b16 %v40
  %v199 = vunpack.c.l.b16 %v41
  %v200 = vunpack.c.h.b16 %v41
  %v201 = vunpack.c.l.b16 %v42
  %v202 = vunpack.c.h.b16 %v42
  %v203 = vunpack.c.l.b16 %v43
  %v204 = vunpack.c.h.b16 %v43
  %v205 = vunpack.c.l.b16 %v44
  %v206 = vunpack.c.h.b16 %v44
  %v207 = vunpack.c.l.b16 %v45
  %v208 = vunpack.c.h.b16 %v45
  %v209 = vunpack.c.l.b16 %v46
  %v210 = vunpack.c.h.b16 %v46
  %v211 = vunpack.c.l.b16 %v47
  %v212 = vunpack.c.h.b16 %v47
  %v213 = vunpack.c.l.b16 %v48
  %v214 = vunpack.c.h.b16 %v48
  %v215 = vunpack.c.l.b16 %v49
  %v216 = vunpack.c.h.b16 %v49
  %v217 = vunpack.c.l.b16 %v50
  %v218 = vunpack.c.h.b16 %v50
  %v219 = vunpack.c.l.b16 %v51
  %v220 = vunpack.c.h.b16 %v51
  %v221 = vunpack.c.l.b16 %v52
  %v222 = vunpack.c.h.b16 %v52
  %v223 = vunpack.c.l.b16 %v53
  %v224 = vunpack.c.h.b16 %v53
  %v225 = vunpack.c.l.b16 %v54
  %v226 = vunpack.c.h.b16 %v54
  %v227 = vunpack.c.l.b16 %v55
  %v228 = vunpack.c.h.b16 %v55
  %v229 = vunpack.c.l.b16 %v56
  %v230 = vunpack.c.h.b16 %v56
  %v231 = vunpack.c.l.b16 %v57
  %v232 = vunpack.c.h.b16 %v57
  %v233 = vunpack.c.l.b16 %v58
  %v234 = vunpack.c.h.b16 %v58
  %v235 = vpack.c.b16 %v173, %v171
  %v236 = vpack.c.b16 %v174, %v172
  %v237 = vpack.c.b16 %v177, %v175
  %v238 = vpack.c.b16 %v178, %v176
  %v239 = vpack.c.b16 %v181, %v179
  %v240 = vpack.c.b16 %v182, %v180
  %v241 = vpack.c.b16 %v185, %v183
  %v242 = vpack.c.b16 %v186, %v184
  %v243 = vpack.c.b16 %v189, %v187
  %v244 = vpack.c.b16 %v190, %v188
  %v245 = vpack.c.b16 %v193, %v191
  %v246 = vpack.c.b16 %v194, %v192
  %v247 = vpack.c.b16 %v197, %v195
  %v248 = vpack.c.b16 %v198, %v196
  %v249 = vpack.c.b16 %v201, %v199
  %v250 = vpack.c.b16 %v202, %v200
  %v251 = vpack.c.b16 %v205, %v203
  %v252 = vpack.c.b16 %v206, %v204
  %v253 = vpack.c.b16 %v209, %v207
  %v254 = vpack.c.b16 %v210, %v208
  %v255 = vpack.c.b16 %v213, %v211
  %v256 = vpack.c.b16 %v214, %v212
  %v257 = vpack.c.b16 %v217, %v215
  %v258 = vpack.c.b16 %v218, %v216
  %v259 = vpack.c.b16 %v221, %v219
  %v260 = vpack.c.b16 %v222, %v220
  %v261 = vpack.c.b16 %v225, %v223
  %v262 = vpack.c.b16 %v226, %v224
  %v263 = vpack.c.b16 %v229, %v227
  %v264 = vpack.c.b16 %v230, %v228
  %v265 = vpack.c.b16 %v233, %v231
  %v266 = vpack.c.b16 %v234, %v232
  %299 = vmatpush.bf16.msra.mxu0 %v249
  %300 = vmatpush.bf16.msra.mxu0 %v247
  %301 = vmatpush.bf16.msra.mxu0 %v245
  %302 = vmatpush.bf16.msra.mxu0 %v243
  %303 = vmatpush.bf16.msra.mxu0 %v241
  %304 = vmatpush.bf16.msra.mxu0 %v239
  %305 = vmatpush.bf16.msra.mxu0 %v237
  %306 = vmatpush.bf16.msra.mxu0 %v235
  %307 = vmatmul.bf16.gmra.mxu0 %v107
  %v308 = vpop.f32.mrf.mxu0
  %v309 = vadd.f32 0.0, %v308
  %v310 = vpop.f32.mrf.mxu0
  %v311 = vadd.f32 0.0, %v310
  %312 = vmatmul.bf16.gmra.mxu0 %v109
  %v313 = vpop.f32.mrf.mxu0
  %v314 = vadd.f32 0.0, %v313
  %v315 = vpop.f32.mrf.mxu0
  %v316 = vadd.f32 0.0, %v315
  %317 = vmatmul.bf16.gmra.mxu0 %v111
  %v318 = vpop.f32.mrf.mxu0
  %v319 = vadd.f32 0.0, %v318
  %v320 = vpop.f32.mrf.mxu0
  %v321 = vadd.f32 0.0, %v320
  %322 = vmatmul.bf16.gmra.mxu0 %v113
  %v323 = vpop.f32.mrf.mxu0
  %v324 = vadd.f32 0.0, %v323
  %v325 = vpop.f32.mrf.mxu0
  %v326 = vadd.f32 0.0, %v325
  %327 = vmatmul.bf16.gmra.mxu0 %v115
  %v328 = vpop.f32.mrf.mxu0
  %v329 = vadd.f32 0.0, %v328
  %v330 = vpop.f32.mrf.mxu0
  %v331 = vadd.f32 0.0, %v330
  %332 = vmatmul.bf16.gmra.mxu0 %v117
  %v333 = vpop.f32.mrf.mxu0
  %v334 = vadd.f32 0.0, %v333
  %v335 = vpop.f32.mrf.mxu0
  %v336 = vadd.f32 0.0, %v335
  %337 = vmatmul.bf16.gmra.mxu0 %v119
  %v338 = vpop.f32.mrf.mxu0
  %v339 = vadd.f32 0.0, %v338
  %v340 = vpop.f32.mrf.mxu0
  %v341 = vadd.f32 0.0, %v340
  %342 = vmatmul.bf16.gmra.mxu0 %v121
  %v343 = vpop.f32.mrf.mxu0
  %v344 = vadd.f32 0.0, %v343
  %v345 = vpop.f32.mrf.mxu0
  %v346 = vadd.f32 0.0, %v345
  %347 = vdwg.mxu0
  %348 = vmatpush.bf16.msra.mxu0 %v265
  %349 = vmatpush.bf16.msra.mxu0 %v263
  %350 = vmatpush.bf16.msra.mxu0 %v261
  %351 = vmatpush.bf16.msra.mxu0 %v259
  %352 = vmatpush.bf16.msra.mxu0 %v257
  %353 = vmatpush.bf16.msra.mxu0 %v255
  %354 = vmatpush.bf16.msra.mxu0 %v253
  %355 = vmatpush.bf16.msra.mxu0 %v251
  %356 = vmatmul.bf16.gmra.mxu0 %v108
  %v357 = vpop.f32.mrf.mxu0
  %v358 = vadd.f32 %v309, %v357
  %v359 = vpop.f32.mrf.mxu0
  %v360 = vadd.f32 %v311, %v359
  %361 = vmatmul.bf16.gmra.mxu0 %v110
  %v362 = vpop.f32.mrf.mxu0
  %v363 = vadd.f32 %v314, %v362
  %v364 = vpop.f32.mrf.mxu0
  %v365 = vadd.f32 %v316, %v364
  %366 = vmatmul.bf16.gmra.mxu0 %v112
  %v367 = vpop.f32.mrf.mxu0
  %v368 = vadd.f32 %v319, %v367
  %v369 = vpop.f32.mrf.mxu0
  %v370 = vadd.f32 %v321, %v369
  %371 = vmatmul.bf16.gmra.mxu0 %v114
  %v372 = vpop.f32.mrf.mxu0
  %v373 = vadd.f32 %v324, %v372
  %v374 = vpop.f32.mrf.mxu0
  %v375 = vadd.f32 %v326, %v374
  %376 = vmatmul.bf16.gmra.mxu0 %v116
  %v377 = vpop.f32.mrf.mxu0
  %v378 = vadd.f32 %v329, %v377
  %v379 = vpop.f32.mrf.mxu0
  %v380 = vadd.f32 %v331, %v379
  %381 = vmatmul.bf16.gmra.mxu0 %v118
  %v382 = vpop.f32.mrf.mxu0
  %v383 = vadd.f32 %v334, %v382
  %v384 = vpop.f32.mrf.mxu0
  %v385 = vadd.f32 %v336, %v384
  %386 = vmatmul.bf16.gmra.mxu0 %v120
  %v387 = vpop.f32.mrf.mxu0
  %v388 = vadd.f32 %v339, %v387
  %v389 = vpop.f32.mrf.mxu0
  %v390 = vadd.f32 %v341, %v389
  %391 = vmatmul.bf16.gmra.mxu0 %v122
  %v392 = vpop.f32.mrf.mxu0
  %v393 = vadd.f32 %v344, %v392
  %v394 = vpop.f32.mrf.mxu0
  %v395 = vadd.f32 %v346, %v394
  %396 = vdwg.mxu0
  %397 = vmatpush.bf16.msra.mxu0 %v250
  %398 = vmatpush.bf16.msra.mxu0 %v248
  %399 = vmatpush.bf16.msra.mxu0 %v246
  %400 = vmatpush.bf16.msra.mxu0 %v244
  %401 = vmatpush.bf16.msra.mxu0 %v242
  %402 = vmatpush.bf16.msra.mxu0 %v240
  %403 = vmatpush.bf16.msra.mxu0 %v238
  %404 = vmatpush.bf16.msra.mxu0 %v236
  %405 = vmatmul.bf16.gmra.mxu0 %v107
  %v406 = vpop.f32.mrf.mxu0
  %v407 = vadd.f32 0.0, %v406
  %v408 = vpop.f32.mrf.mxu0
  %v409 = vadd.f32 0.0, %v408
  %410 = vmatmul.bf16.gmra.mxu0 %v109
  %v411 = vpop.f32.mrf.mxu0
  %v412 = vadd.f32 0.0, %v411
  %v413 = vpop.f32.mrf.mxu0
  %v414 = vadd.f32 0.0, %v413
  %415 = vmatmul.bf16.gmra.mxu0 %v111
  %v416 = vpop.f32.mrf.mxu0
  %v417 = vadd.f32 0.0, %v416
  %v418 = vpop.f32.mrf.mxu0
  %v419 = vadd.f32 0.0, %v418
  %420 = vmatmul.bf16.gmra.mxu0 %v113
  %v421 = vpop.f32.mrf.mxu0
  %v422 = vadd.f32 0.0, %v421
  %v423 = vpop.f32.mrf.mxu0
  %v424 = vadd.f32 0.0, %v423
  %425 = vmatmul.bf16.gmra.mxu0 %v115
  %v426 = vpop.f32.mrf.mxu0
  %v427 = vadd.f32 0.0, %v426
  %v428 = vpop.f32.mrf.mxu0
  %v429 = vadd.f32 0.0, %v428
  %430 = vmatmul.bf16.gmra.mxu0 %v117
  %v431 = vpop.f32.mrf.mxu0
  %v432 = vadd.f32 0.0, %v431
  %v433 = vpop.f32.mrf.mxu0
  %v434 = vadd.f32 0.0, %v433
  %435 = vmatmul.bf16.gmra.mxu0 %v119
  %v436 = vpop.f32.mrf.mxu0
  %v437 = vadd.f32 0.0, %v436
  %v438 = vpop.f32.mrf.mxu0
  %v439 = vadd.f32 0.0, %v438
  %440 = vmatmul.bf16.gmra.mxu0 %v121
  %v441 = vpop.f32.mrf.mxu0
  %v442 = vadd.f32 0.0, %v441
  %v443 = vpop.f32.mrf.mxu0
  %v444 = vadd.f32 0.0, %v443
  %445 = vdwg.mxu0
  %446 = vmatpush.bf16.msra.mxu0 %v266
  %447 = vmatpush.bf16.msra.mxu0 %v264
  %448 = vmatpush.bf16.msra.mxu0 %v262
  %449 = vmatpush.bf16.msra.mxu0 %v260
  %450 = vmatpush.bf16.msra.mxu0 %v258
  %451 = vmatpush.bf16.msra.mxu0 %v256
  %452 = vmatpush.bf16.msra.mxu0 %v254
  %453 = vmatpush.bf16.msra.mxu0 %v252
  %454 = vmatmul.bf16.gmra.mxu0 %v108
  %v455 = vpop.f32.mrf.mxu0
  %v456 = vadd.f32 %v407, %v455
  %v457 = vpop.f32.mrf.mxu0
  %v458 = vadd.f32 %v409, %v457
  %459 = vmatmul.bf16.gmra.mxu0 %v110
  %v460 = vpop.f32.mrf.mxu0
  %v461 = vadd.f32 %v412, %v460
  %v462 = vpop.f32.mrf.mxu0
  %v463 = vadd.f32 %v414, %v462
  %464 = vmatmul.bf16.gmra.mxu0 %v112
  %v465 = vpop.f32.mrf.mxu0
  %v466 = vadd.f32 %v417, %v465
  %v467 = vpop.f32.mrf.mxu0
  %v468 = vadd.f32 %v419, %v467
  %469 = vmatmul.bf16.gmra.mxu0 %v114
  %v470 = vpop.f32.mrf.mxu0
  %v471 = vadd.f32 %v422, %v470
  %v472 = vpop.f32.mrf.mxu0
  %v473 = vadd.f32 %v424, %v472
  %474 = vmatmul.bf16.gmra.mxu0 %v116
  %v475 = vpop.f32.mrf.mxu0
  %v476 = vadd.f32 %v427, %v475
  %v477 = vpop.f32.mrf.mxu0
  %v478 = vadd.f32 %v429, %v477
  %479 = vmatmul.bf16.gmra.mxu0 %v118
  %v480 = vpop.f32.mrf.mxu0
  %v481 = vadd.f32 %v432, %v480
  %v482 = vpop.f32.mrf.mxu0
  %v483 = vadd.f32 %v434, %v482
  %484 = vmatmul.bf16.gmra.mxu0 %v120
  %v485 = vpop.f32.mrf.mxu0
  %v486 = vadd.f32 %v437, %v485
  %v487 = vpop.f32.mrf.mxu0
  %v488 = vadd.f32 %v439, %v487
  %489 = vmatmul.bf16.gmra.mxu0 %v122
  %v490 = vpop.f32.mrf.mxu0
  %v491 = vadd.f32 %v442, %v490
  %v492 = vpop.f32.mrf.mxu0
  %v493 = vadd.f32 %v444, %v492
  %494 = vdwg.mxu0
  %v495 = vpack.c.bf16 %v456, %v358
  %v496 = vpack.c.bf16 %v458, %v360
  %v497 = vpack.c.bf16 %v461, %v363
  %v498 = vpack.c.bf16 %v463, %v365
  %v499 = vpack.c.bf16 %v466, %v368
  %v500 = vpack.c.bf16 %v468, %v370
  %v501 = vpack.c.bf16 %v471, %v373
  %v502 = vpack.c.bf16 %v473, %v375
  %v503 = vpack.c.bf16 %v476, %v378
  %v504 = vpack.c.bf16 %v478, %v380
  %v505 = vpack.c.bf16 %v481, %v383
  %v506 = vpack.c.bf16 %v483, %v385
  %v507 = vpack.c.bf16 %v486, %v388
  %v508 = vpack.c.bf16 %v488, %v390
  %v509 = vpack.c.bf16 %v491, %v393
  %v510 = vpack.c.bf16 %v493, %v395
  %511 = vst [vmem:[%s2] sm:$0xff] %v495
  %512 = vst [vmem:[%s2 + $0x8] sm:$0xff] %v496
  %513 = vst [vmem:[%s2 + $0x10] sm:$0xff] %v497
  %514 = vst [vmem:[%s2 + $0x18] sm:$0xff] %v498
  %515 = vst [vmem:[%s2 + $0x20] sm:$0xff] %v499
  %516 = vst [vmem:[%s2 + $0x28] sm:$0xff] %v500
  %517 = vst [vmem:[%s2 + $0x30] sm:$0xff] %v501
  %518 = vst [vmem:[%s2 + $0x38] sm:$0xff] %v502
  %519 = vst [vmem:[%s2 + $0x40] sm:$0xff] %v503
  %520 = vst [vmem:[%s2 + $0x48] sm:$0xff] %v504
  %521 = vst [vmem:[%s2 + $0x50] sm:$0xff] %v505
  %522 = vst [vmem:[%s2 + $0x58] sm:$0xff] %v506
  %523 = vst [vmem:[%s2 + $0x60] sm:$0xff] %v507
  %524 = vst [vmem:[%s2 + $0x68] sm:$0xff] %v508
  %525 = vst [vmem:[%s2 + $0x70] sm:$0xff] %v509
  %526 = vst [vmem:[%s2 + $0x78] sm:$0xff] %v510
  // Predicated region
  $region10: #{psp_forward.3} parent=0 // pred_check
    _
  $region11: #{psp_forward.3} parent=0 // pred_check_branch
    %528 = sbr.rel (0) target = $region13
  $region12: #{psp_forward.3} parent=0 // pred_region
    _
  $region13: #{psp_forward.3} parent=0 // pred_fallthru
    _
  // Predicated region
  $region14: #{psp_forward.3} parent=0 // pred_check
    _
  $region15: #{psp_forward.3} parent=0 // pred_check_branch
    %530 = sbr.rel (0) target = $region17
  $region16: #{psp_forward.3} parent=0 // pred_region
    _
  $region17: #{psp_forward.3} parent=0 // pred_fallthru
    _

// kernel: psp_forward.4
$region0: #{psp_forward.4}
  #allocation0 [shape = 'u32[]', space=smem, size = 0x4, offset = 0x4, fixed_abs, tag = 'smem constant byte address 0x4 - core index']
  #allocation1 [shape = 'u32[72,128]{1,0:T(1,128)}', space=vmem, size = 0x9000, scoped, tag = 'internal scratch']
  %s0 = inlined_call_operand.vmem [shape: bf16[1,128,256], index: 0, kind: input, shape index: {}]
  %s1 = inlined_call_operand.vmem [shape: bf16[2,256,256], index: 1, kind: input, shape index: {}]
  %s2 = inlined_call_operand.vmem [shape: bf16[2,128,256], index: 2, kind: output, shape index: {}]
  %s3 = sld [smem:[#allocation0]]
  $region41: #{psp_forward.4} parent=0
    _
  %s5 = ssub.s32 1, %s3
  %s6 = scalar_select 0, %s5, %s3
  loop: start=0, step=1, limit=4
  $region2: #{psp_forward.4} parent=0 // loop_pre_header
    _
  $region3: #{psp_forward.4} parent=0 // loop_header
    %s8 = sphi 0, %s12
    %p9 = scmp.ge.s32.totalorder %s8, 4
    %s15 = sphi 0, %s41
    %s16 = sphi 0, %s37
    %s17 = sphi 0, %s33
    %s18 = sphi 0, %s29
    %s19 = sphi 0, %s15
    %s20 = sphi 0, %s16
    %s21 = sphi 0, %s17
    %s22 = sphi 0, %s18
    %s23 = sphi 0, %s19
    %s24 = sphi 0, %s20
    %s25 = sphi 0, %s21
    %s26 = sphi 0, %s22
    %s46 = sphi 0, %s48
    %s49 = sphi 0, %s46
    %s50 = sphi 0, %s49
    %s66 = sphi 0, %s50
    %s76 = sphi 0, %s78
    %s79 = sphi 0, %s76
    %s80 = sphi 0, %s79
    %s96 = sphi 0, %s80
    %s106 = sphi 0, %s108
    %s109 = sphi 0, %s106
    %s110 = sphi 0, %s109
    %s126 = sphi 0, %s110
  $region4: #{psp_forward.4} parent=0 // loop_header_branch
    %11 = sbr.rel (%p9) target = $region8
  $region5: #{psp_forward.4} parent=0 // loop_body
    %s13 = ssub.s32 %s8, 1
    %s14 = ssub.s32 %s8, 2
    %s27 = sadd.s32 1, %s18
    %p28 = scmp.ge.s32.totalorder %s27, 1
    %s29 = scalar_select %p28, 0, %s27
    %s30 = sadd.s32 1, %s17
    %s31 = scalar_select %p28, %s30, %s17
    %p32 = scmp.ge.s32.totalorder %s31, 1
    %s33 = scalar_select %p32, 0, %s31
    %s34 = sadd.s32 1, %s16
    %s35 = scalar_select %p32, %s34, %s16
    %p36 = scmp.ge.s32.totalorder %s35, 1
    %s37 = scalar_select %p36, 0, %s35
    %s38 = sadd.s32 1, %s15
    %s39 = scalar_select %p36, %s38, %s15
    %p40 = scmp.ge.s32.totalorder %s39, 2
    %s41 = scalar_select %p40, 0, %s39
    %s42 = ssub.s32 %s16, %s37
    %s43 = ssub.s32 %s18, %s29
    %s44 = sor.u32 %s42, %s43
    %p45 = scmp.eq.s32.totalorder %s44, 0
    %s47 = sadd.s32 %s46, 1
    %s48 = scalar_select %p45, %s46, %s47
    %p51 = pneg %p45
    %p52 = scmp.eq.s32.totalorder %s8, 1
    %p53 = por %p51, %p52
    %p54 = scmp.ne.s32.totalorder %s46, %s49
    %p55 = scmp.eq.s32.totalorder %s8, 0
    %p56 = por %p54, %p55
    %p57 = scmp.ne.s32.totalorder %s46, %s49
    %p58 = scmp.eq.s32.totalorder %s13, 1
    %p59 = por %p57, %p58
    %p60 = scmp.ne.s32.totalorder %s49, %s50
    %p61 = scmp.eq.s32.totalorder %s13, 0
    %p62 = por %p60, %p61
    %p63 = scmp.ne.s32.totalorder %s49, %s50
    %p64 = scmp.eq.s32.totalorder %s14, 1
    %p65 = por %p63, %p64
    %p67 = scmp.ne.s32.totalorder %s50, %s66
    %p68 = scmp.eq.s32.totalorder %s14, 0
    %p69 = por %p67, %p68
    %s70 = ssub.s32 %s15, %s41
    %s71 = ssub.s32 %s18, %s29
    %s72 = sor.u32 %s70, %s71
    %s73 = ssub.s32 %s17, %s33
    %s74 = sor.u32 %s72, %s73
    %p75 = scmp.eq.s32.totalorder %s74, 0
    %s77 = sadd.s32 %s76, 1
    %s78 = scalar_select %p75, %s76, %s77
    %p81 = pneg %p75
    %p82 = scmp.eq.s32.totalorder %s8, 1
    %p83 = por %p81, %p82
    %p84 = scmp.ne.s32.totalorder %s76, %s79
    %p85 = scmp.eq.s32.totalorder %s8, 0
    %p86 = por %p84, %p85
    %p87 = scmp.ne.s32.totalorder %s76, %s79
    %p88 = scmp.eq.s32.totalorder %s13, 1
    %p89 = por %p87, %p88
    %p90 = scmp.ne.s32.totalorder %s79, %s80
    %p91 = scmp.eq.s32.totalorder %s13, 0
    %p92 = por %p90, %p91
    %p93 = scmp.ne.s32.totalorder %s79, %s80
    %p94 = scmp.eq.s32.totalorder %s14, 1
    %p95 = por %p93, %p94
    %p97 = scmp.ne.s32.totalorder %s80, %s96
    %p98 = scmp.eq.s32.totalorder %s14, 0
    %p99 = por %p97, %p98
    %s100 = ssub.s32 %s15, %s41
    %s101 = ssub.s32 %s16, %s37
    %s102 = sor.u32 %s100, %s101
    %s103 = ssub.s32 %s17, %s33
    %s104 = sor.u32 %s102, %s103
    %p105 = scmp.eq.s32.totalorder %s104, 0
    %s107 = sadd.s32 %s106, 1
    %s108 = scalar_select %p105, %s106, %s107
    %p111 = pneg %p105
    %p112 = scmp.eq.s32.totalorder %s8, 1
    %p113 = por %p111, %p112
    %p114 = scmp.ne.s32.totalorder %s106, %s109
    %p115 = scmp.eq.s32.totalorder %s8, 0
    %p116 = por %p114, %p115
    %p117 = scmp.ne.s32.totalorder %s106, %s109
    %p118 = scmp.eq.s32.totalorder %s13, 1
    %p119 = por %p117, %p118
    %p120 = scmp.ne.s32.totalorder %s109, %s110
    %p121 = scmp.eq.s32.totalorder %s13, 0
    %p122 = por %p120, %p121
    %p123 = scmp.ne.s32.totalorder %s109, %s110
    %p124 = scmp.eq.s32.totalorder %s14, 1
    %p125 = por %p123, %p124
    %p127 = scmp.ne.s32.totalorder %s110, %s126
    %p128 = scmp.eq.s32.totalorder %s14, 0
    %p129 = por %p127, %p128
    %p130 = scmp.le.s32.totalorder 1, %s8
    %p131 = scmp.lt.s32.totalorder %s8, 3
    %p132 = pnand %p130, %p131
    %p133 = pneg %p132
    // Predicated region
    $region9: #{psp_forward.4} parent=5 // pred_check
      _
    $region10: #{psp_forward.4} parent=5 // pred_check_branch
      %135 = sbr.rel (%p132) target = $region12
    $region11: #{psp_forward.4} parent=5 // pred_region
      %s136 = ssub.s32 %s8, 1
      // Predicated region
      $region13: #{psp_forward.4} parent=11 // pred_check
        %p137 = pneg %p62
      $region14: #{psp_forward.4} parent=11 // pred_check_branch
        %139 = sbr.rel (%p137) target = $region16
      $region15: #{psp_forward.4} parent=11 // pred_region
        %s140 = smul.u32 16, %s20
        %s141 = smul.u32 2, %s22
        %p142 = scmp.lt.s32.totalorder %s140, 15
        %s143 = scalar_select %p142, %s140, 15
        %p144 = scmp.lt.s32.totalorder %s141, 1
        %s145 = scalar_select %p144, %s141, 1
        %s146 = smul.addr %s143, 2
        %s147 = sadd.s32 %s145, %s146
        %s148 = smul.addr %s147, 4
        %s149 = scalar_lea.vmem %s0, %s148
        %s150 = smul.u32 16, %s20
        %s151 = smul.u32 2, %s22
      $region16: #{psp_forward.4} parent=11 // pred_fallthru
        _
    $region12: #{psp_forward.4} parent=5 // pred_fallthru
      _
    %p152 = scmp.lt.s32.totalorder %s8, 2
    // Predicated region
    $region17: #{psp_forward.4} parent=5 // pred_check
      %p153 = pneg %p152
    $region18: #{psp_forward.4} parent=5 // pred_check_branch
      %155 = sbr.rel (%p153) target = $region20
    $region19: #{psp_forward.4} parent=5 // pred_region
      // Predicated region
      $region21: #{psp_forward.4} parent=19 // pred_check
        %p156 = pneg %p86
      $region22: #{psp_forward.4} parent=19 // pred_check_branch
        %158 = sbr.rel (%p156) target = $region24
      $region23: #{psp_forward.4} parent=19 // pred_region
        %s159 = smul.u32 32, %s18
        %s160 = smul.u32 2, %s17
        %p161 = scmp.lt.s32.totalorder %s15, 1
        %s162 = scalar_select %p161, %s15, 1
        %p163 = scmp.lt.s32.totalorder %s159, 31
        %s164 = scalar_select %p163, %s159, 31
        %p165 = scmp.lt.s32.totalorder %s160, 1
        %s166 = scalar_select %p165, %s160, 1
        %s167 = smul.addr %s164, 2
        %s168 = sadd.s32 %s166, %s167
        %s169 = smul.addr %s162, 64
        %s170 = sadd.s32 %s168, %s169
        %s171 = smul.addr %s170, 4
        %s172 = scalar_lea.vmem %s1, %s171
        %s173 = smul.u32 32, %s18
        %s174 = smul.u32 2, %s17
      $region24: #{psp_forward.4} parent=19 // pred_fallthru
        _
    $region20: #{psp_forward.4} parent=5 // pred_fallthru
      _
    %p175 = scmp.le.s32.totalorder 1, %s8
    %p176 = scmp.lt.s32.totalorder %s8, 3
    %p177 = pnand %p175, %p176
    %p178 = pneg %p177
    // Predicated region
    $region25: #{psp_forward.4} parent=5 // pred_check
      _
    $region26: #{psp_forward.4} parent=5 // pred_check_branch
      %180 = sbr.rel (%p177) target = $region28
    $region27: #{psp_forward.4} parent=5 // pred_region
      %s181 = ssub.s32 %s8, 1
      %s182 = smul.u32 16, %s20
      %s183 = smul.u32 2, %s22
      %p184 = scmp.lt.s32.totalorder %s182, 15
      %s185 = scalar_select %p184, %s182, 15
      %p186 = scmp.lt.s32.totalorder %s183, 1
      %s187 = scalar_select %p186, %s183, 1
      %s188 = smul.addr %s185, 2
      %s189 = sadd.s32 %s187, %s188
      %s190 = smul.addr %s189, 4
      %s191 = scalar_lea.vmem %s0, %s190
      %p192 = pneg %p62
      %p193 = pneg %p59
      %s194 = smul.u32 32, %s22
      %s195 = smul.u32 2, %s21
      %p196 = scmp.lt.s32.totalorder %s19, 1
      %s197 = scalar_select %p196, %s19, 1
      %p198 = scmp.lt.s32.totalorder %s194, 31
      %s199 = scalar_select %p198, %s194, 31
      %p200 = scmp.lt.s32.totalorder %s195, 1
      %s201 = scalar_select %p200, %s195, 1
      %s202 = smul.addr %s199, 2
      %s203 = sadd.s32 %s201, %s202
      %s204 = smul.addr %s197, 64
      %s205 = sadd.s32 %s203, %s204
      %s206 = smul.addr %s205, 4
      %s207 = scalar_lea.vmem %s1, %s206
      %p208 = pneg %p92
      %p209 = pneg %p89
      %p210 = pneg %p122
      %p211 = pneg %p119
      %s212 = smul.u32 16, %s20
      %s213 = smul.u32 2, %s21
      %p214 = scmp.lt.s32.totalorder %s19, 1
      %s215 = scalar_select %p214, %s19, 1
      %p216 = scmp.lt.s32.totalorder %s212, 15
      %s217 = scalar_select %p216, %s212, 15
      %p218 = scmp.lt.s32.totalorder %s213, 1
      %s219 = scalar_select %p218, %s213, 1
      %s220 = smul.addr %s217, 2
      %s221 = sadd.s32 %s219, %s220
      %s222 = smul.addr %s215, 32
      %s223 = sadd.s32 %s221, %s222
      %s224 = smul.addr %s223, 4
      %s225 = scalar_lea.vmem %s2, %s224
      %s226 = smul.u32 16, %s20
      %s227 = smul.u32 2, %s22
      %p228 = scmp.lt.s32.totalorder %s226, 15
      %s229 = scalar_select %p228, %s226, 15
      %p230 = scmp.lt.s32.totalorder %s227, 1
      %s231 = scalar_select %p230, %s227, 1
      %s232 = smul.addr %s229, 2
      %s233 = sadd.s32 %s231, %s232
      %s234 = smul.addr %s233, 4
      %s235 = scalar_lea.vmem %s0, %s234
      %s236 = smul.u32 16, %s20
      %s237 = smul.u32 2, %s22
      %s238 = smul.u32 32, %s22
      %s239 = smul.u32 2, %s21
      %p240 = scmp.lt.s32.totalorder %s19, 1
      %s241 = scalar_select %p240, %s19, 1
      %p242 = scmp.lt.s32.totalorder %s238, 31
      %s243 = scalar_select %p242, %s238, 31
      %p244 = scmp.lt.s32.totalorder %s239, 1
      %s245 = scalar_select %p244, %s239, 1
      %s246 = smul.addr %s243, 2
      %s247 = sadd.s32 %s245, %s246
      %s248 = smul.addr %s241, 64
      %s249 = sadd.s32 %s247, %s248
      %s250 = smul.addr %s249, 4
      %s251 = scalar_lea.vmem %s1, %s250
      %s252 = smul.u32 32, %s22
      %s253 = smul.u32 2, %s21
      %s254 = smul.u32 16, %s20
      %s255 = smul.u32 2, %s21
      %p256 = scmp.lt.s32.totalorder %s19, 1
      %s257 = scalar_select %p256, %s19, 1
      %p258 = scmp.lt.s32.totalorder %s254, 15
      %s259 = scalar_select %p258, %s254, 15
      %p260 = scmp.lt.s32.totalorder %s255, 1
      %s261 = scalar_select %p260, %s255, 1
      %s262 = smul.addr %s259, 2
      %s263 = sadd.s32 %s261, %s262
      %s264 = smul.addr %s257, 32
      %s265 = sadd.s32 %s263, %s264
      %s266 = smul.addr %s265, 4
      %s267 = scalar_lea.vmem %s2, %s266
      %s268 = smul.u32 16, %s20
      %s269 = smul.u32 2, %s21
      %v270 = vld [vmem:[%s235] sm:$0xff]
      %v271 = vld [vmem:[%s235 + $0x8] sm:$0xff]
      %v272 = vld [vmem:[%s235 + $0x10] sm:$0xff]
      %v273 = vld [vmem:[%s235 + $0x18] sm:$0xff]
      %v274 = vld [vmem:[%s235 + $0x20] sm:$0xff]
      %v275 = vld [vmem:[%s235 + $0x28] sm:$0xff]
      %v276 = vld [vmem:[%s235 + $0x30] sm:$0xff]
      %v277 = vld [vmem:[%s235 + $0x38] sm:$0xff]
      %v278 = vld [vmem:[%s235 + $0x40] sm:$0xff]
      %v279 = vld [vmem:[%s235 + $0x48] sm:$0xff]
      %v280 = vld [vmem:[%s235 + $0x50] sm:$0xff]
      %v281 = vld [vmem:[%s235 + $0x58] sm:$0xff]
      %v282 = vld [vmem:[%s235 + $0x60] sm:$0xff]
      %v283 = vld [vmem:[%s235 + $0x68] sm:$0xff]
      %v284 = vld [vmem:[%s235 + $0x70] sm:$0xff]
      %v285 = vld [vmem:[%s235 + $0x78] sm:$0xff]
      %v286 = vld [vmem:[%s251] sm:$0xff]
      %v287 = vld [vmem:[%s251 + $0x8] sm:$0xff]
      %v288 = vld [vmem:[%s251 + $0x10] sm:$0xff]
      %v289 = vld [vmem:[%s251 + $0x18] sm:$0xff]
      %v290 = vld [vmem:[%s251 + $0x20] sm:$0xff]
      %v291 = vld [vmem:[%s251 + $0x28] sm:$0xff]
      %v292 = vld [vmem:[%s251 + $0x30] sm:$0xff]
      %v293 = vld [vmem:[%s251 + $0x38] sm:$0xff]
      %v294 = vld [vmem:[%s251 + $0x40] sm:$0xff]
      %v295 = vld [vmem:[%s251 + $0x48] sm:$0xff]
      %v296 = vld [vmem:[%s251 + $0x50] sm:$0xff]
      %v297 = vld [vmem:[%s251 + $0x58] sm:$0xff]
      %v298 = vld [vmem:[%s251 + $0x60] sm:$0xff]
      %v299 = vld [vmem:[%s251 + $0x68] sm:$0xff]
      %v300 = vld [vmem:[%s251 + $0x70] sm:$0xff]
      %v301 = vld [vmem:[%s251 + $0x78] sm:$0xff]
      %v302 = vld [vmem:[%s251 + $0x80] sm:$0xff]
      %v303 = vld [vmem:[%s251 + $0x88] sm:$0xff]
      %v304 = vld [vmem:[%s251 + $0x90] sm:$0xff]
      %v305 = vld [vmem:[%s251 + $0x98] sm:$0xff]
      %v306 = vld [vmem:[%s251 + $0xa0] sm:$0xff]
      %v307 = vld [vmem:[%s251 + $0xa8] sm:$0xff]
      %v308 = vld [vmem:[%s251 + $0xb0] sm:$0xff]
      %v309 = vld [vmem:[%s251 + $0xb8] sm:$0xff]
      %v310 = vld [vmem:[%s251 + $0xc0] sm:$0xff]
      %v311 = vld [vmem:[%s251 + $0xc8] sm:$0xff]
      %v312 = vld [vmem:[%s251 + $0xd0] sm:$0xff]
      %v313 = vld [vmem:[%s251 + $0xd8] sm:$0xff]
      %v314 = vld [vmem:[%s251 + $0xe0] sm:$0xff]
      %v315 = vld [vmem:[%s251 + $0xe8] sm:$0xff]
      %v316 = vld [vmem:[%s251 + $0xf0] sm:$0xff]
      %v317 = vld [vmem:[%s251 + $0xf8] sm:$0xff]
      %v334 = vunpack.c.l.b16 %v270
      %v335 = vunpack.c.h.b16 %v270
      %v336 = vunpack.c.l.b16 %v271
      %v337 = vunpack.c.h.b16 %v271
      %v338 = vunpack.c.l.b16 %v272
      %v339 = vunpack.c.h.b16 %v272
      %v340 = vunpack.c.l.b16 %v273
      %v341 = vunpack.c.h.b16 %v273
      %v342 = vunpack.c.l.b16 %v274
      %v343 = vunpack.c.h.b16 %v274
      %v344 = vunpack.c.l.b16 %v275
      %v345 = vunpack.c.h.b16 %v275
      %v346 = vunpack.c.l.b16 %v276
      %v347 = vunpack.c.h.b16 %v276
      %v348 = vunpack.c.l.b16 %v277
      %v349 = vunpack.c.h.b16 %v277
      %v350 = vunpack.c.l.b16 %v278
      %v351 = vunpack.c.h.b16 %v278
      %v352 = vunpack.c.l.b16 %v279
      %v353 = vunpack.c.h.b16 %v279
      %v354 = vunpack.c.l.b16 %v280
      %v355 = vunpack.c.h.b16 %v280
      %v356 = vunpack.c.l.b16 %v281
      %v357 = vunpack.c.h.b16 %v281
      %v358 = vunpack.c.l.b16 %v282
      %v359 = vunpack.c.h.b16 %v282
      %v360 = vunpack.c.l.b16 %v283
      %v361 = vunpack.c.h.b16 %v283
      %v362 = vunpack.c.l.b16 %v284
      %v363 = vunpack.c.h.b16 %v284
      %v364 = vunpack.c.l.b16 %v285
      %v365 = vunpack.c.h.b16 %v285
      %v366 = vpack.c.b16 %v336, %v334
      %v367 = vpack.c.b16 %v337, %v335
      %v368 = vpack.c.b16 %v340, %v338
      %v369 = vpack.c.b16 %v341, %v339
      %v370 = vpack.c.b16 %v344, %v342
      %v371 = vpack.c.b16 %v345, %v343
      %v372 = vpack.c.b16 %v348, %v346
      %v373 = vpack.c.b16 %v349, %v347
      %v374 = vpack.c.b16 %v352, %v350
      %v375 = vpack.c.b16 %v353, %v351
      %v376 = vpack.c.b16 %v356, %v354
      %v377 = vpack.c.b16 %v357, %v355
      %v378 = vpack.c.b16 %v360, %v358
      %v379 = vpack.c.b16 %v361, %v359
      %v380 = vpack.c.b16 %v364, %v362
      %v381 = vpack.c.b16 %v365, %v363
      %v430 = vunpack.c.l.b16 %v286
      %v431 = vunpack.c.h.b16 %v286
      %v432 = vunpack.c.l.b16 %v287
      %v433 = vunpack.c.h.b16 %v287
      %v434 = vunpack.c.l.b16 %v288
      %v435 = vunpack.c.h.b16 %v288
      %v436 = vunpack.c.l.b16 %v289
      %v437 = vunpack.c.h.b16 %v289
      %v438 = vunpack.c.l.b16 %v290
      %v439 = vunpack.c.h.b16 %v290
      %v440 = vunpack.c.l.b16 %v291
      %v441 = vunpack.c.h.b16 %v291
      %v442 = vunpack.c.l.b16 %v292
      %v443 = vunpack.c.h.b16 %v292
      %v444 = vunpack.c.l.b16 %v293
      %v445 = vunpack.c.h.b16 %v293
      %v446 = vunpack.c.l.b16 %v294
      %v447 = vunpack.c.h.b16 %v294
      %v448 = vunpack.c.l.b16 %v295
      %v449 = vunpack.c.h.b16 %v295
      %v450 = vunpack.c.l.b16 %v296
      %v451 = vunpack.c.h.b16 %v296
      %v452 = vunpack.c.l.b16 %v297
      %v453 = vunpack.c.h.b16 %v297
      %v454 = vunpack.c.l.b16 %v298
      %v455 = vunpack.c.h.b16 %v298
      %v456 = vunpack.c.l.b16 %v299
      %v457 = vunpack.c.h.b16 %v299
      %v458 = vunpack.c.l.b16 %v300
      %v459 = vunpack.c.h.b16 %v300
      %v460 = vunpack.c.l.b16 %v301
      %v461 = vunpack.c.h.b16 %v301
      %v462 = vunpack.c.l.b16 %v302
      %v463 = vunpack.c.h.b16 %v302
      %v464 = vunpack.c.l.b16 %v303
      %v465 = vunpack.c.h.b16 %v303
      %v466 = vunpack.c.l.b16 %v304
      %v467 = vunpack.c.h.b16 %v304
      %v468 = vunpack.c.l.b16 %v305
      %v469 = vunpack.c.h.b16 %v305
      %v470 = vunpack.c.l.b16 %v306
      %v471 = vunpack.c.h.b16 %v306
      %v472 = vunpack.c.l.b16 %v307
      %v473 = vunpack.c.h.b16 %v307
      %v474 = vunpack.c.l.b16 %v308
      %v475 = vunpack.c.h.b16 %v308
      %v476 = vunpack.c.l.b16 %v309
      %v477 = vunpack.c.h.b16 %v309
      %v478 = vunpack.c.l.b16 %v310
      %v479 = vunpack.c.h.b16 %v310
      %v480 = vunpack.c.l.b16 %v311
      %v481 = vunpack.c.h.b16 %v311
      %v482 = vunpack.c.l.b16 %v312
      %v483 = vunpack.c.h.b16 %v312
      %v484 = vunpack.c.l.b16 %v313
      %v485 = vunpack.c.h.b16 %v313
      %v486 = vunpack.c.l.b16 %v314
      %v487 = vunpack.c.h.b16 %v314
      %v488 = vunpack.c.l.b16 %v315
      %v489 = vunpack.c.h.b16 %v315
      %v490 = vunpack.c.l.b16 %v316
      %v491 = vunpack.c.h.b16 %v316
      %v492 = vunpack.c.l.b16 %v317
      %v493 = vunpack.c.h.b16 %v317
      %v494 = vpack.c.b16 %v432, %v430
      %v495 = vpack.c.b16 %v433, %v431
      %v496 = vpack.c.b16 %v436, %v434
      %v497 = vpack.c.b16 %v437, %v435
      %v498 = vpack.c.b16 %v440, %v438
      %v499 = vpack.c.b16 %v441, %v439
      %v500 = vpack.c.b16 %v444, %v442
      %v501 = vpack.c.b16 %v445, %v443
      %v502 = vpack.c.b16 %v448, %v446
      %v503 = vpack.c.b16 %v449, %v447
      %v504 = vpack.c.b16 %v452, %v450
      %v505 = vpack.c.b16 %v453, %v451
      %v506 = vpack.c.b16 %v456, %v454
      %v507 = vpack.c.b16 %v457, %v455
      %v508 = vpack.c.b16 %v460, %v458
      %v509 = vpack.c.b16 %v461, %v459
      %v510 = vpack.c.b16 %v464, %v462
      %v511 = vpack.c.b16 %v465, %v463
      %v512 = vpack.c.b16 %v468, %v466
      %v513 = vpack.c.b16 %v469, %v467
      %v514 = vpack.c.b16 %v472, %v470
      %v515 = vpack.c.b16 %v473, %v471
      %v516 = vpack.c.b16 %v476, %v474
      %v517 = vpack.c.b16 %v477, %v475
      %v518 = vpack.c.b16 %v480, %v478
      %v519 = vpack.c.b16 %v481, %v479
      %v520 = vpack.c.b16 %v484, %v482
      %v521 = vpack.c.b16 %v485, %v483
      %v522 = vpack.c.b16 %v488, %v486
      %v523 = vpack.c.b16 %v489, %v487
      %v524 = vpack.c.b16 %v492, %v490
      %v525 = vpack.c.b16 %v493, %v491
      %558 = vmatpush.bf16.msra.mxu0 %v508
      %559 = vmatpush.bf16.msra.mxu0 %v506
      %560 = vmatpush.bf16.msra.mxu0 %v504
      %561 = vmatpush.bf16.msra.mxu0 %v502
      %562 = vmatpush.bf16.msra.mxu0 %v500
      %563 = vmatpush.bf16.msra.mxu0 %v498
      %564 = vmatpush.bf16.msra.mxu0 %v496
      %565 = vmatpush.bf16.msra.mxu0 %v494
      %566 = vmatmul.bf16.gmra.mxu0 %v366
      %v567 = vpop.f32.mrf.mxu0
      %v568 = vadd.f32 0.0, %v567
      %v569 = vpop.f32.mrf.mxu0
      %v570 = vadd.f32 0.0, %v569
      %571 = vmatmul.bf16.gmra.mxu0 %v368
      %v572 = vpop.f32.mrf.mxu0
      %v573 = vadd.f32 0.0, %v572
      %v574 = vpop.f32.mrf.mxu0
      %v575 = vadd.f32 0.0, %v574
      %576 = vmatmul.bf16.gmra.mxu0 %v370
      %v577 = vpop.f32.mrf.mxu0
      %v578 = vadd.f32 0.0, %v577
      %v579 = vpop.f32.mrf.mxu0
      %v580 = vadd.f32 0.0, %v579
      %581 = vmatmul.bf16.gmra.mxu0 %v372
      %v582 = vpop.f32.mrf.mxu0
      %v583 = vadd.f32 0.0, %v582
      %v584 = vpop.f32.mrf.mxu0
      %v585 = vadd.f32 0.0, %v584
      %586 = vmatmul.bf16.gmra.mxu0 %v374
      %v587 = vpop.f32.mrf.mxu0
      %v588 = vadd.f32 0.0, %v587
      %v589 = vpop.f32.mrf.mxu0
      %v590 = vadd.f32 0.0, %v589
      %591 = vmatmul.bf16.gmra.mxu0 %v376
      %v592 = vpop.f32.mrf.mxu0
      %v593 = vadd.f32 0.0, %v592
      %v594 = vpop.f32.mrf.mxu0
      %v595 = vadd.f32 0.0, %v594
      %596 = vmatmul.bf16.gmra.mxu0 %v378
      %v597 = vpop.f32.mrf.mxu0
      %v598 = vadd.f32 0.0, %v597
      %v599 = vpop.f32.mrf.mxu0
      %v600 = vadd.f32 0.0, %v599
      %601 = vmatmul.bf16.gmra.mxu0 %v380
      %v602 = vpop.f32.mrf.mxu0
      %v603 = vadd.f32 0.0, %v602
      %v604 = vpop.f32.mrf.mxu0
      %v605 = vadd.f32 0.0, %v604
      %606 = vdwg.mxu0
      %607 = vmatpush.bf16.msra.mxu0 %v524
      %608 = vmatpush.bf16.msra.mxu0 %v522
      %609 = vmatpush.bf16.msra.mxu0 %v520
      %610 = vmatpush.bf16.msra.mxu0 %v518
      %611 = vmatpush.bf16.msra.mxu0 %v516
      %612 = vmatpush.bf16.msra.mxu0 %v514
      %613 = vmatpush.bf16.msra.mxu0 %v512
      %614 = vmatpush.bf16.msra.mxu0 %v510
      %615 = vmatmul.bf16.gmra.mxu0 %v367
      %v616 = vpop.f32.mrf.mxu0
      %v617 = vadd.f32 %v568, %v616
      %v618 = vpop.f32.mrf.mxu0
      %v619 = vadd.f32 %v570, %v618
      %620 = vmatmul.bf16.gmra.mxu0 %v369
      %v621 = vpop.f32.mrf.mxu0
      %v622 = vadd.f32 %v573, %v621
      %v623 = vpop.f32.mrf.mxu0
      %v624 = vadd.f32 %v575, %v623
      %625 = vmatmul.bf16.gmra.mxu0 %v371
      %v626 = vpop.f32.mrf.mxu0
      %v627 = vadd.f32 %v578, %v626
      %v628 = vpop.f32.mrf.mxu0
      %v629 = vadd.f32 %v580, %v628
      %630 = vmatmul.bf16.gmra.mxu0 %v373
      %v631 = vpop.f32.mrf.mxu0
      %v632 = vadd.f32 %v583, %v631
      %v633 = vpop.f32.mrf.mxu0
      %v634 = vadd.f32 %v585, %v633
      %635 = vmatmul.bf16.gmra.mxu0 %v375
      %v636 = vpop.f32.mrf.mxu0
      %v637 = vadd.f32 %v588, %v636
      %v638 = vpop.f32.mrf.mxu0
      %v639 = vadd.f32 %v590, %v638
      %640 = vmatmul.bf16.gmra.mxu0 %v377
      %v641 = vpop.f32.mrf.mxu0
      %v642 = vadd.f32 %v593, %v641
      %v643 = vpop.f32.mrf.mxu0
      %v644 = vadd.f32 %v595, %v643
      %645 = vmatmul.bf16.gmra.mxu0 %v379
      %v646 = vpop.f32.mrf.mxu0
      %v647 = vadd.f32 %v598, %v646
      %v648 = vpop.f32.mrf.mxu0
      %v649 = vadd.f32 %v600, %v648
      %650 = vmatmul.bf16.gmra.mxu0 %v381
      %v651 = vpop.f32.mrf.mxu0
      %v652 = vadd.f32 %v603, %v651
      %v653 = vpop.f32.mrf.mxu0
      %v654 = vadd.f32 %v605, %v653
      %655 = vdwg.mxu0
      %656 = vmatpush.bf16.msra.mxu0 %v509
      %657 = vmatpush.bf16.msra.mxu0 %v507
      %658 = vmatpush.bf16.msra.mxu0 %v505
      %659 = vmatpush.bf16.msra.mxu0 %v503
      %660 = vmatpush.bf16.msra.mxu0 %v501
      %661 = vmatpush.bf16.msra.mxu0 %v499
      %662 = vmatpush.bf16.msra.mxu0 %v497
      %663 = vmatpush.bf16.msra.mxu0 %v495
      %664 = vmatmul.bf16.gmra.mxu0 %v366
      %v665 = vpop.f32.mrf.mxu0
      %v666 = vadd.f32 0.0, %v665
      %v667 = vpop.f32.mrf.mxu0
      %v668 = vadd.f32 0.0, %v667
      %669 = vmatmul.bf16.gmra.mxu0 %v368
      %v670 = vpop.f32.mrf.mxu0
      %v671 = vadd.f32 0.0, %v670
      %v672 = vpop.f32.mrf.mxu0
      %v673 = vadd.f32 0.0, %v672
      %674 = vmatmul.bf16.gmra.mxu0 %v370
      %v675 = vpop.f32.mrf.mxu0
      %v676 = vadd.f32 0.0, %v675
      %v677 = vpop.f32.mrf.mxu0
      %v678 = vadd.f32 0.0, %v677
      %679 = vmatmul.bf16.gmra.mxu0 %v372
      %v680 = vpop.f32.mrf.mxu0
      %v681 = vadd.f32 0.0, %v680
      %v682 = vpop.f32.mrf.mxu0
      %v683 = vadd.f32 0.0, %v682
      %684 = vmatmul.bf16.gmra.mxu0 %v374
      %v685 = vpop.f32.mrf.mxu0
      %v686 = vadd.f32 0.0, %v685
      %v687 = vpop.f32.mrf.mxu0
      %v688 = vadd.f32 0.0, %v687
      %689 = vmatmul.bf16.gmra.mxu0 %v376
      %v690 = vpop.f32.mrf.mxu0
      %v691 = vadd.f32 0.0, %v690
      %v692 = vpop.f32.mrf.mxu0
      %v693 = vadd.f32 0.0, %v692
      %694 = vmatmul.bf16.gmra.mxu0 %v378
      %v695 = vpop.f32.mrf.mxu0
      %v696 = vadd.f32 0.0, %v695
      %v697 = vpop.f32.mrf.mxu0
      %v698 = vadd.f32 0.0, %v697
      %699 = vmatmul.bf16.gmra.mxu0 %v380
      %v700 = vpop.f32.mrf.mxu0
      %v701 = vadd.f32 0.0, %v700
      %v702 = vpop.f32.mrf.mxu0
      %v703 = vadd.f32 0.0, %v702
      %704 = vdwg.mxu0
      %705 = vmatpush.bf16.msra.mxu0 %v525
      %706 = vmatpush.bf16.msra.mxu0 %v523
      %707 = vmatpush.bf16.msra.mxu0 %v521
      %708 = vmatpush.bf16.msra.mxu0 %v519
      %709 = vmatpush.bf16.msra.mxu0 %v517
      %710 = vmatpush.bf16.msra.mxu0 %v515
      %711 = vmatpush.bf16.msra.mxu0 %v513
      %712 = vmatpush.bf16.msra.mxu0 %v511
      %713 = vmatmul.bf16.gmra.mxu0 %v367
      %v714 = vpop.f32.mrf.mxu0
      %v715 = vadd.f32 %v666, %v714
      %v716 = vpop.f32.mrf.mxu0
      %v717 = vadd.f32 %v668, %v716
      %718 = vmatmul.bf16.gmra.mxu0 %v369
      %v719 = vpop.f32.mrf.mxu0
      %v720 = vadd.f32 %v671, %v719
      %v721 = vpop.f32.mrf.mxu0
      %v722 = vadd.f32 %v673, %v721
      %723 = vmatmul.bf16.gmra.mxu0 %v371
      %v724 = vpop.f32.mrf.mxu0
      %v725 = vadd.f32 %v676, %v724
      %v726 = vpop.f32.mrf.mxu0
      %v727 = vadd.f32 %v678, %v726
      %728 = vmatmul.bf16.gmra.mxu0 %v373
      %v729 = vpop.f32.mrf.mxu0
      %v730 = vadd.f32 %v681, %v729
      %v731 = vpop.f32.mrf.mxu0
      %v732 = vadd.f32 %v683, %v731
      %733 = vmatmul.bf16.gmra.mxu0 %v375
      %v734 = vpop.f32.mrf.mxu0
      %v735 = vadd.f32 %v686, %v734
      %v736 = vpop.f32.mrf.mxu0
      %v737 = vadd.f32 %v688, %v736
      %738 = vmatmul.bf16.gmra.mxu0 %v377
      %v739 = vpop.f32.mrf.mxu0
      %v740 = vadd.f32 %v691, %v739
      %v741 = vpop.f32.mrf.mxu0
      %v742 = vadd.f32 %v693, %v741
      %743 = vmatmul.bf16.gmra.mxu0 %v379
      %v744 = vpop.f32.mrf.mxu0
      %v745 = vadd.f32 %v696, %v744
      %v746 = vpop.f32.mrf.mxu0
      %v747 = vadd.f32 %v698, %v746
      %748 = vmatmul.bf16.gmra.mxu0 %v381
      %v749 = vpop.f32.mrf.mxu0
      %v750 = vadd.f32 %v701, %v749
      %v751 = vpop.f32.mrf.mxu0
      %v752 = vadd.f32 %v703, %v751
      %753 = vdwg.mxu0
      %v754 = vpack.c.bf16 %v715, %v617
      %v755 = vpack.c.bf16 %v717, %v619
      %v756 = vpack.c.bf16 %v720, %v622
      %v757 = vpack.c.bf16 %v722, %v624
      %v758 = vpack.c.bf16 %v725, %v627
      %v759 = vpack.c.bf16 %v727, %v629
      %v760 = vpack.c.bf16 %v730, %v632
      %v761 = vpack.c.bf16 %v732, %v634
      %v762 = vpack.c.bf16 %v735, %v637
      %v763 = vpack.c.bf16 %v737, %v639
      %v764 = vpack.c.bf16 %v740, %v642
      %v765 = vpack.c.bf16 %v742, %v644
      %v766 = vpack.c.bf16 %v745, %v647
      %v767 = vpack.c.bf16 %v747, %v649
      %v768 = vpack.c.bf16 %v750, %v652
      %v769 = vpack.c.bf16 %v752, %v654
      %770 = vst [vmem:[%s267] sm:$0xff] %v754
      %771 = vst [vmem:[%s267 + $0x8] sm:$0xff] %v755
      %772 = vst [vmem:[%s267 + $0x10] sm:$0xff] %v756
      %773 = vst [vmem:[%s267 + $0x18] sm:$0xff] %v757
      %774 = vst [vmem:[%s267 + $0x20] sm:$0xff] %v758
      %775 = vst [vmem:[%s267 + $0x28] sm:$0xff] %v759
      %776 = vst [vmem:[%s267 + $0x30] sm:$0xff] %v760
      %777 = vst [vmem:[%s267 + $0x38] sm:$0xff] %v761
      %778 = vst [vmem:[%s267 + $0x40] sm:$0xff] %v762
      %779 = vst [vmem:[%s267 + $0x48] sm:$0xff] %v763
      %780 = vst [vmem:[%s267 + $0x50] sm:$0xff] %v764
      %781 = vst [vmem:[%s267 + $0x58] sm:$0xff] %v765
      %782 = vst [vmem:[%s267 + $0x60] sm:$0xff] %v766
      %783 = vst [vmem:[%s267 + $0x68] sm:$0xff] %v767
      %784 = vst [vmem:[%s267 + $0x70] sm:$0xff] %v768
      %785 = vst [vmem:[%s267 + $0x78] sm:$0xff] %v769
      %s786 = smul.u32 16, %s20
      %s787 = smul.u32 2, %s21
      %p788 = scmp.lt.s32.totalorder %s19, 1
      %s789 = scalar_select %p788, %s19, 1
      %p790 = scmp.lt.s32.totalorder %s786, 15
      %s791 = scalar_select %p790, %s786, 15
      %p792 = scmp.lt.s32.totalorder %s787, 1
      %s793 = scalar_select %p792, %s787, 1
      %s794 = smul.addr %s791, 2
      %s795 = sadd.s32 %s793, %s794
      %s796 = smul.addr %s789, 32
      %s797 = sadd.s32 %s795, %s796
      %s798 = smul.addr %s797, 4
      %s799 = scalar_lea.vmem %s2, %s798
      // Predicated region
      $region29: #{psp_forward.4} parent=27 // pred_check
        %p800 = pneg %p119
      $region30: #{psp_forward.4} parent=27 // pred_check_branch
        %802 = sbr.rel (%p800) target = $region32
      $region31: #{psp_forward.4} parent=27 // pred_region
        %s803 = smul.u32 16, %s20
        %s804 = smul.u32 2, %s21
      $region32: #{psp_forward.4} parent=27 // pred_fallthru
        _
    $region28: #{psp_forward.4} parent=5 // pred_fallthru
      _
    %p805 = scmp.le.s32.totalorder 2, %s8
    // Predicated region
    $region33: #{psp_forward.4} parent=5 // pred_check
      %p806 = pneg %p805
    $region34: #{psp_forward.4} parent=5 // pred_check_branch
      %808 = sbr.rel (%p806) target = $region36
    $region35: #{psp_forward.4} parent=5 // pred_region
      %s809 = ssub.s32 %s8, 2
      // Predicated region
      $region37: #{psp_forward.4} parent=35 // pred_check
        %p810 = pneg %p125
      $region38: #{psp_forward.4} parent=35 // pred_check_branch
        %812 = sbr.rel (%p810) target = $region40
      $region39: #{psp_forward.4} parent=35 // pred_region
        %s813 = smul.u32 16, %s24
        %s814 = smul.u32 2, %s25
        %p815 = scmp.lt.s32.totalorder %s23, 1
        %s816 = scalar_select %p815, %s23, 1
        %p817 = scmp.lt.s32.totalorder %s813, 15
        %s818 = scalar_select %p817, %s813, 15
        %p819 = scmp.lt.s32.totalorder %s814, 1
        %s820 = scalar_select %p819, %s814, 1
        %s821 = smul.addr %s818, 2
        %s822 = sadd.s32 %s820, %s821
        %s823 = smul.addr %s816, 32
        %s824 = sadd.s32 %s822, %s823
        %s825 = smul.addr %s824, 4
        %s826 = scalar_lea.vmem %s2, %s825
      $region40: #{psp_forward.4} parent=35 // pred_fallthru
        _
    $region36: #{psp_forward.4} parent=5 // pred_fallthru
      _
  $region6: #{psp_forward.4} parent=0 // loop_footer
    %s12 = sadd.s32 1, %s8
  $region7: #{psp_forward.4} parent=0 // loop_footer_branch
    %7 = sbr.rel target = $region3
  $region8: #{psp_forward.4} parent=0 // loop_exit
    _

// kernel: psp_forward.5
$region0: #{psp_forward.5}
  #allocation0 [shape = 'u32[]', space=smem, size = 0x4, offset = 0x4, fixed_abs, tag = 'smem constant byte address 0x4 - core index']
  #allocation1 [shape = 'u32[72,128]{1,0:T(1,128)}', space=vmem, size = 0x9000, scoped, tag = 'internal scratch']
  %s0 = inlined_call_operand.vmem [shape: bf16[1,128,128], index: 0, kind: input, shape index: {}]
  %s1 = inlined_call_operand.vmem [shape: bf16[2,128,256], index: 1, kind: input, shape index: {}]
  %s2 = inlined_call_operand.vmem [shape: bf16[2,128,256], index: 2, kind: input, shape index: {}]
  %s3 = inlined_call_operand.vmem [shape: bf16[1,256,256], index: 3, kind: input, shape index: {}]
  %s4 = inlined_call_operand.vmem [shape: f32[128,1], index: 4, kind: input, shape index: {}]
  %s5 = inlined_call_operand.vmem [shape: f32[2,128,256], index: 5, kind: output, shape index: {}]
  %s6 = sld [smem:[#allocation0]]
  $region53: #{psp_forward.5} parent=0
    _
  %s8 = ssub.s32 1, %s6
  %s9 = scalar_select 0, %s8, %s6
  loop: start=0, step=1, limit=4
  $region2: #{psp_forward.5} parent=0 // loop_pre_header
    _
  $region3: #{psp_forward.5} parent=0 // loop_header
    %s11 = sphi 0, %s15
    %p12 = scmp.ge.s32.totalorder %s11, 4
    %s18 = sphi 0, %s44
    %s19 = sphi 0, %s40
    %s20 = sphi 0, %s36
    %s21 = sphi 0, %s32
    %s22 = sphi 0, %s18
    %s23 = sphi 0, %s19
    %s24 = sphi 0, %s20
    %s25 = sphi 0, %s21
    %s26 = sphi 0, %s22
    %s27 = sphi 0, %s23
    %s28 = sphi 0, %s24
    %s29 = sphi 0, %s25
    %s49 = sphi 0, %s51
    %s52 = sphi 0, %s49
    %s53 = sphi 0, %s52
    %s69 = sphi 0, %s53
    %s79 = sphi 0, %s81
    %s82 = sphi 0, %s79
    %s83 = sphi 0, %s82
    %s99 = sphi 0, %s83
    %s107 = sphi 0, %s109
    %s110 = sphi 0, %s107
    %s111 = sphi 0, %s110
    %s127 = sphi 0, %s111
    %s133 = sphi 0, %s135
    %s136 = sphi 0, %s133
    %s137 = sphi 0, %s136
    %s153 = sphi 0, %s137
    %s159 = sphi 0, %s161
    %s162 = sphi 0, %s159
    %s163 = sphi 0, %s162
    %s179 = sphi 0, %s163
    %s189 = sphi 0, %s191
    %s192 = sphi 0, %s189
    %s193 = sphi 0, %s192
    %s209 = sphi 0, %s193
  $region4: #{psp_forward.5} parent=0 // loop_header_branch
    %14 = sbr.rel (%p12) target = $region8
  $region5: #{psp_forward.5} parent=0 // loop_body
    %s16 = ssub.s32 %s11, 1
    %s17 = ssub.s32 %s11, 2
    %s30 = sadd.s32 1, %s21
    %p31 = scmp.ge.s32.totalorder %s30, 1
    %s32 = scalar_select %p31, 0, %s30
    %s33 = sadd.s32 1, %s20
    %s34 = scalar_select %p31, %s33, %s20
    %p35 = scmp.ge.s32.totalorder %s34, 1
    %s36 = scalar_select %p35, 0, %s34
    %s37 = sadd.s32 1, %s19
    %s38 = scalar_select %p35, %s37, %s19
    %p39 = scmp.ge.s32.totalorder %s38, 1
    %s40 = scalar_select %p39, 0, %s38
    %s41 = sadd.s32 1, %s18
    %s42 = scalar_select %p39, %s41, %s18
    %p43 = scmp.ge.s32.totalorder %s42, 2
    %s44 = scalar_select %p43, 0, %s42
    %s45 = ssub.s32 %s19, %s40
    %s46 = ssub.s32 %s21, %s32
    %s47 = sor.u32 %s45, %s46
    %p48 = scmp.eq.s32.totalorder %s47, 0
    %s50 = sadd.s32 %s49, 1
    %s51 = scalar_select %p48, %s49, %s50
    %p54 = pneg %p48
    %p55 = scmp.eq.s32.totalorder %s11, 1
    %p56 = por %p54, %p55
    %p57 = scmp.ne.s32.totalorder %s49, %s52
    %p58 = scmp.eq.s32.totalorder %s11, 0
    %p59 = por %p57, %p58
    %p60 = scmp.ne.s32.totalorder %s49, %s52
    %p61 = scmp.eq.s32.totalorder %s16, 1
    %p62 = por %p60, %p61
    %p63 = scmp.ne.s32.totalorder %s52, %s53
    %p64 = scmp.eq.s32.totalorder %s16, 0
    %p65 = por %p63, %p64
    %p66 = scmp.ne.s32.totalorder %s52, %s53
    %p67 = scmp.eq.s32.totalorder %s17, 1
    %p68 = por %p66, %p67
    %p70 = scmp.ne.s32.totalorder %s53, %s69
    %p71 = scmp.eq.s32.totalorder %s17, 0
    %p72 = por %p70, %p71
    %s73 = ssub.s32 %s18, %s44
    %s74 = ssub.s32 %s21, %s32
    %s75 = sor.u32 %s73, %s74
    %s76 = ssub.s32 %s20, %s36
    %s77 = sor.u32 %s75, %s76
    %p78 = scmp.eq.s32.totalorder %s77, 0
    %s80 = sadd.s32 %s79, 1
    %s81 = scalar_select %p78, %s79, %s80
    %p84 = pneg %p78
    %p85 = scmp.eq.s32.totalorder %s11, 1
    %p86 = por %p84, %p85
    %p87 = scmp.ne.s32.totalorder %s79, %s82
    %p88 = scmp.eq.s32.totalorder %s11, 0
    %p89 = por %p87, %p88
    %p90 = scmp.ne.s32.totalorder %s79, %s82
    %p91 = scmp.eq.s32.totalorder %s16, 1
    %p92 = por %p90, %p91
    %p93 = scmp.ne.s32.totalorder %s82, %s83
    %p94 = scmp.eq.s32.totalorder %s16, 0
    %p95 = por %p93, %p94
    %p96 = scmp.ne.s32.totalorder %s82, %s83
    %p97 = scmp.eq.s32.totalorder %s17, 1
    %p98 = por %p96, %p97
    %p100 = scmp.ne.s32.totalorder %s83, %s99
    %p101 = scmp.eq.s32.totalorder %s17, 0
    %p102 = por %p100, %p101
    %s103 = ssub.s32 %s18, %s44
    %s104 = ssub.s32 %s19, %s40
    %s105 = sor.u32 %s103, %s104
    %p106 = scmp.eq.s32.totalorder %s105, 0
    %s108 = sadd.s32 %s107, 1
    %s109 = scalar_select %p106, %s107, %s108
    %p112 = pneg %p106
    %p113 = scmp.eq.s32.totalorder %s11, 1
    %p114 = por %p112, %p113
    %p115 = scmp.ne.s32.totalorder %s107, %s110
    %p116 = scmp.eq.s32.totalorder %s11, 0
    %p117 = por %p115, %p116
    %p118 = scmp.ne.s32.totalorder %s107, %s110
    %p119 = scmp.eq.s32.totalorder %s16, 1
    %p120 = por %p118, %p119
    %p121 = scmp.ne.s32.totalorder %s110, %s111
    %p122 = scmp.eq.s32.totalorder %s16, 0
    %p123 = por %p121, %p122
    %p124 = scmp.ne.s32.totalorder %s110, %s111
    %p125 = scmp.eq.s32.totalorder %s17, 1
    %p126 = por %p124, %p125
    %p128 = scmp.ne.s32.totalorder %s111, %s127
    %p129 = scmp.eq.s32.totalorder %s17, 0
    %p130 = por %p128, %p129
    %s131 = ssub.s32 %s20, %s36
    %p132 = scmp.eq.s32.totalorder %s131, 0
    %s134 = sadd.s32 %s133, 1
    %s135 = scalar_select %p132, %s133, %s134
    %p138 = pneg %p132
    %p139 = scmp.eq.s32.totalorder %s11, 1
    %p140 = por %p138, %p139
    %p141 = scmp.ne.s32.totalorder %s133, %s136
    %p142 = scmp.eq.s32.totalorder %s11, 0
    %p143 = por %p141, %p142
    %p144 = scmp.ne.s32.totalorder %s133, %s136
    %p145 = scmp.eq.s32.totalorder %s16, 1
    %p146 = por %p144, %p145
    %p147 = scmp.ne.s32.totalorder %s136, %s137
    %p148 = scmp.eq.s32.totalorder %s16, 0
    %p149 = por %p147, %p148
    %p150 = scmp.ne.s32.totalorder %s136, %s137
    %p151 = scmp.eq.s32.totalorder %s17, 1
    %p152 = por %p150, %p151
    %p154 = scmp.ne.s32.totalorder %s137, %s153
    %p155 = scmp.eq.s32.totalorder %s17, 0
    %p156 = por %p154, %p155
    %s157 = ssub.s32 %s19, %s40
    %p158 = scmp.eq.s32.totalorder %s157, 0
    %s160 = sadd.s32 %s159, 1
    %s161 = scalar_select %p158, %s159, %s160
    %p164 = pneg %p158
    %p165 = scmp.eq.s32.totalorder %s11, 1
    %p166 = por %p164, %p165
    %p167 = scmp.ne.s32.totalorder %s159, %s162
    %p168 = scmp.eq.s32.totalorder %s11, 0
    %p169 = por %p167, %p168
    %p170 = scmp.ne.s32.totalorder %s159, %s162
    %p171 = scmp.eq.s32.totalorder %s16, 1
    %p172 = por %p170, %p171
    %p173 = scmp.ne.s32.totalorder %s162, %s163
    %p174 = scmp.eq.s32.totalorder %s16, 0
    %p175 = por %p173, %p174
    %p176 = scmp.ne.s32.totalorder %s162, %s163
    %p177 = scmp.eq.s32.totalorder %s17, 1
    %p178 = por %p176, %p177
    %p180 = scmp.ne.s32.totalorder %s163, %s179
    %p181 = scmp.eq.s32.totalorder %s17, 0
    %p182 = por %p180, %p181
    %s183 = ssub.s32 %s18, %s44
    %s184 = ssub.s32 %s19, %s40
    %s185 = sor.u32 %s183, %s184
    %s186 = ssub.s32 %s20, %s36
    %s187 = sor.u32 %s185, %s186
    %p188 = scmp.eq.s32.totalorder %s187, 0
    %s190 = sadd.s32 %s189, 1
    %s191 = scalar_select %p188, %s189, %s190
    %p194 = pneg %p188
    %p195 = scmp.eq.s32.totalorder %s11, 1
    %p196 = por %p194, %p195
    %p197 = scmp.ne.s32.totalorder %s189, %s192
    %p198 = scmp.eq.s32.totalorder %s11, 0
    %p199 = por %p197, %p198
    %p200 = scmp.ne.s32.totalorder %s189, %s192
    %p201 = scmp.eq.s32.totalorder %s16, 1
    %p202 = por %p200, %p201
    %p203 = scmp.ne.s32.totalorder %s192, %s193
    %p204 = scmp.eq.s32.totalorder %s16, 0
    %p205 = por %p203, %p204
    %p206 = scmp.ne.s32.totalorder %s192, %s193
    %p207 = scmp.eq.s32.totalorder %s17, 1
    %p208 = por %p206, %p207
    %p210 = scmp.ne.s32.totalorder %s193, %s209
    %p211 = scmp.eq.s32.totalorder %s17, 0
    %p212 = por %p210, %p211
    %p213 = scmp.le.s32.totalorder 1, %s11
    %p214 = scmp.lt.s32.totalorder %s11, 3
    %p215 = pnand %p213, %p214
    %p216 = pneg %p215
    // Predicated region
    $region9: #{psp_forward.5} parent=5 // pred_check
      _
    $region10: #{psp_forward.5} parent=5 // pred_check_branch
      %218 = sbr.rel (%p215) target = $region12
    $region11: #{psp_forward.5} parent=5 // pred_region
      %s219 = ssub.s32 %s11, 1
      // Predicated region
      $region13: #{psp_forward.5} parent=11 // pred_check
        %p220 = pneg %p65
      $region14: #{psp_forward.5} parent=11 // pred_check_branch
        %222 = sbr.rel (%p220) target = $region16
      $region15: #{psp_forward.5} parent=11 // pred_region
        %s223 = smul.u32 16, %s23
        %p224 = scmp.lt.s32.totalorder %s223, 15
        %s225 = scalar_select %p224, %s223, 15
        %p226 = scmp.lt.s32.totalorder %s25, 0
        %s227 = scalar_select %p226, %s25, 0
        %s228 = sadd.s32 %s227, %s225
        %s229 = smul.addr %s228, 4
        %s230 = scalar_lea.vmem %s0, %s229
        %s231 = smul.u32 16, %s23
      $region16: #{psp_forward.5} parent=11 // pred_fallthru
        _
      // Predicated region
      $region17: #{psp_forward.5} parent=11 // pred_check
        %p232 = pneg %p149
      $region18: #{psp_forward.5} parent=11 // pred_check_branch
        %234 = sbr.rel (%p232) target = $region20
      $region19: #{psp_forward.5} parent=11 // pred_region
        %s235 = smul.u32 2, %s24
        %p236 = scmp.lt.s32.totalorder %s235, 1
        %s237 = scalar_select %p236, %s235, 1
        %s238 = smul.addr %s237, 4
        %s239 = scalar_lea.vmem %s3, %s238
        %s240 = smul.u32 2, %s24
      $region20: #{psp_forward.5} parent=11 // pred_fallthru
        _
      // Predicated region
      $region21: #{psp_forward.5} parent=11 // pred_check
        %p241 = pneg %p175
      $region22: #{psp_forward.5} parent=11 // pred_check_branch
        %243 = sbr.rel (%p241) target = $region24
      $region23: #{psp_forward.5} parent=11 // pred_region
        %s244 = smul.u32 16, %s23
        %p245 = scmp.lt.s32.totalorder %s244, 15
        %s246 = scalar_select %p245, %s244, 15
        %s247 = smul.addr %s246, 8
        %s248 = scalar_lea.vmem %s4, %s247
        %s249 = smul.u32 16, %s23
      $region24: #{psp_forward.5} parent=11 // pred_fallthru
        _
    $region12: #{psp_forward.5} parent=5 // pred_fallthru
      _
    %p250 = scmp.lt.s32.totalorder %s11, 2
    // Predicated region
    $region25: #{psp_forward.5} parent=5 // pred_check
      %p251 = pneg %p250
    $region26: #{psp_forward.5} parent=5 // pred_check_branch
      %253 = sbr.rel (%p251) target = $region28
    $region27: #{psp_forward.5} parent=5 // pred_region
      // Predicated region
      $region29: #{psp_forward.5} parent=27 // pred_check
        %p254 = pneg %p89
      $region30: #{psp_forward.5} parent=27 // pred_check_branch
        %256 = sbr.rel (%p254) target = $region32
      $region31: #{psp_forward.5} parent=27 // pred_region
        %s257 = smul.u32 16, %s21
        %s258 = smul.u32 2, %s20
        %p259 = scmp.lt.s32.totalorder %s18, 1
        %s260 = scalar_select %p259, %s18, 1
        %p261 = scmp.lt.s32.totalorder %s257, 15
        %s262 = scalar_select %p261, %s257, 15
        %p263 = scmp.lt.s32.totalorder %s258, 1
        %s264 = scalar_select %p263, %s258, 1
        %s265 = smul.addr %s262, 2
        %s266 = sadd.s32 %s264, %s265
        %s267 = smul.addr %s260, 32
        %s268 = sadd.s32 %s266, %s267
        %s269 = smul.addr %s268, 4
        %s270 = scalar_lea.vmem %s1, %s269
        %s271 = smul.u32 16, %s21
        %s272 = smul.u32 2, %s20
      $region32: #{psp_forward.5} parent=27 // pred_fallthru
        _
      // Predicated region
      $region33: #{psp_forward.5} parent=27 // pred_check
        %p273 = pneg %p117
      $region34: #{psp_forward.5} parent=27 // pred_check_branch
        %275 = sbr.rel (%p273) target = $region36
      $region35: #{psp_forward.5} parent=27 // pred_region
        %s276 = smul.u32 16, %s19
        %p277 = scmp.lt.s32.totalorder %s18, 1
        %s278 = scalar_select %p277, %s18, 1
        %p279 = scmp.lt.s32.totalorder %s276, 15
        %s280 = scalar_select %p279, %s276, 15
        %s281 = smul.addr %s280, 2
        %s282 = smul.addr %s278, 32
        %s283 = sadd.s32 %s281, %s282
        %s284 = smul.addr %s283, 4
        %s285 = scalar_lea.vmem %s2, %s284
        %s286 = smul.u32 16, %s19
      $region36: #{psp_forward.5} parent=27 // pred_fallthru
        _
    $region28: #{psp_forward.5} parent=5 // pred_fallthru
      _
    %p287 = scmp.le.s32.totalorder 1, %s11
    %p288 = scmp.lt.s32.totalorder %s11, 3
    %p289 = pnand %p287, %p288
    %p290 = pneg %p289
    // Predicated region
    $region37: #{psp_forward.5} parent=5 // pred_check
      _
    $region38: #{psp_forward.5} parent=5 // pred_check_branch
      %292 = sbr.rel (%p289) target = $region40
    $region39: #{psp_forward.5} parent=5 // pred_region
      %s293 = ssub.s32 %s11, 1
      %s294 = smul.u32 16, %s23
      %p295 = scmp.lt.s32.totalorder %s294, 15
      %s296 = scalar_select %p295, %s294, 15
      %p297 = scmp.lt.s32.totalorder %s25, 0
      %s298 = scalar_select %p297, %s25, 0
      %s299 = sadd.s32 %s298, %s296
      %s300 = smul.addr %s299, 4
      %s301 = scalar_lea.vmem %s0, %s300
      %p302 = pneg %p65
      %p303 = pneg %p62
      %s304 = smul.u32 16, %s25
      %s305 = smul.u32 2, %s24
      %p306 = scmp.lt.s32.totalorder %s22, 1
      %s307 = scalar_select %p306, %s22, 1
      %p308 = scmp.lt.s32.totalorder %s304, 15
      %s309 = scalar_select %p308, %s304, 15
      %p310 = scmp.lt.s32.totalorder %s305, 1
      %s311 = scalar_select %p310, %s305, 1
      %s312 = smul.addr %s309, 2
      %s313 = sadd.s32 %s311, %s312
      %s314 = smul.addr %s307, 32
      %s315 = sadd.s32 %s313, %s314
      %s316 = smul.addr %s315, 4
      %s317 = scalar_lea.vmem %s1, %s316
      %p318 = pneg %p95
      %p319 = pneg %p92
      %s320 = smul.u32 16, %s23
      %p321 = scmp.lt.s32.totalorder %s22, 1
      %s322 = scalar_select %p321, %s22, 1
      %p323 = scmp.lt.s32.totalorder %s320, 15
      %s324 = scalar_select %p323, %s320, 15
      %s325 = smul.addr %s324, 2
      %s326 = smul.addr %s322, 32
      %s327 = sadd.s32 %s325, %s326
      %s328 = smul.addr %s327, 4
      %s329 = scalar_lea.vmem %s2, %s328
      %p330 = pneg %p123
      %p331 = pneg %p120
      %s332 = smul.u32 2, %s24
      %p333 = scmp.lt.s32.totalorder %s332, 1
      %s334 = scalar_select %p333, %s332, 1
      %s335 = smul.addr %s334, 4
      %s336 = scalar_lea.vmem %s3, %s335
      %p337 = pneg %p149
      %p338 = pneg %p146
      %s339 = smul.u32 16, %s23
      %p340 = scmp.lt.s32.totalorder %s339, 15
      %s341 = scalar_select %p340, %s339, 15
      %s342 = smul.addr %s341, 8
      %s343 = scalar_lea.vmem %s4, %s342
      %p344 = pneg %p175
      %p345 = pneg %p172
      %p346 = pneg %p205
      %p347 = pneg %p202
      %s348 = smul.u32 16, %s23
      %s349 = smul.u32 2, %s24
      %p350 = scmp.lt.s32.totalorder %s22, 1
      %s351 = scalar_select %p350, %s22, 1
      %p352 = scmp.lt.s32.totalorder %s348, 15
      %s353 = scalar_select %p352, %s348, 15
      %p354 = scmp.lt.s32.totalorder %s349, 1
      %s355 = scalar_select %p354, %s349, 1
      %s356 = smul.addr %s353, 2
      %s357 = sadd.s32 %s355, %s356
      %s358 = smul.addr %s351, 32
      %s359 = sadd.s32 %s357, %s358
      %s360 = smul.addr %s359, 8
      %s361 = scalar_lea.vmem %s5, %s360
      %s362 = smul.u32 16, %s23
      %p363 = scmp.lt.s32.totalorder %s362, 15
      %s364 = scalar_select %p363, %s362, 15
      %p365 = scmp.lt.s32.totalorder %s25, 0
      %s366 = scalar_select %p365, %s25, 0
      %s367 = sadd.s32 %s366, %s364
      %s368 = smul.addr %s367, 4
      %s369 = scalar_lea.vmem %s0, %s368
      %s370 = smul.u32 16, %s23
      %s371 = smul.u32 16, %s25
      %s372 = smul.u32 2, %s24
      %p373 = scmp.lt.s32.totalorder %s22, 1
      %s374 = scalar_select %p373, %s22, 1
      %p375 = scmp.lt.s32.totalorder %s371, 15
      %s376 = scalar_select %p375, %s371, 15
      %p377 = scmp.lt.s32.totalorder %s372, 1
      %s378 = scalar_select %p377, %s372, 1
      %s379 = smul.addr %s376, 2
      %s380 = sadd.s32 %s378, %s379
      %s381 = smul.addr %s374, 32
      %s382 = sadd.s32 %s380, %s381
      %s383 = smul.addr %s382, 4
      %s384 = scalar_lea.vmem %s1, %s383
      %s385 = smul.u32 16, %s25
      %s386 = smul.u32 2, %s24
      %s387 = smul.u32 16, %s23
      %p388 = scmp.lt.s32.totalorder %s22, 1
      %s389 = scalar_select %p388, %s22, 1
      %p390 = scmp.lt.s32.totalorder %s387, 15
      %s391 = scalar_select %p390, %s387, 15
      %s392 = smul.addr %s391, 2
      %s393 = smul.addr %s389, 32
      %s394 = sadd.s32 %s392, %s393
      %s395 = smul.addr %s394, 4
      %s396 = scalar_lea.vmem %s2, %s395
      %s397 = smul.u32 16, %s23
      %s398 = smul.u32 2, %s24
      %p399 = scmp.lt.s32.totalorder %s398, 1
      %s400 = scalar_select %p399, %s398, 1
      %s401 = smul.addr %s400, 4
      %s402 = scalar_lea.vmem %s3, %s401
      %s403 = smul.u32 2, %s24
      %s404 = smul.u32 16, %s23
      %p405 = scmp.lt.s32.totalorder %s404, 15
      %s406 = scalar_select %p405, %s404, 15
      %s407 = smul.addr %s406, 8
      %s408 = scalar_lea.vmem %s4, %s407
      %s409 = smul.u32 16, %s23
      %s410 = smul.u32 16, %s23
      %s411 = smul.u32 2, %s24
      %p412 = scmp.lt.s32.totalorder %s22, 1
      %s413 = scalar_select %p412, %s22, 1
      %p414 = scmp.lt.s32.totalorder %s410, 15
      %s415 = scalar_select %p414, %s410, 15
      %p416 = scmp.lt.s32.totalorder %s411, 1
      %s417 = scalar_select %p416, %s411, 1
      %s418 = smul.addr %s415, 2
      %s419 = sadd.s32 %s417, %s418
      %s420 = smul.addr %s413, 32
      %s421 = sadd.s32 %s419, %s420
      %s422 = smul.addr %s421, 8
      %s423 = scalar_lea.vmem %s5, %s422
      %s424 = smul.u32 16, %s23
      %s425 = smul.u32 2, %s24
      %v426 = vld [vmem:[%s369] sm:$0xf]
      %v427 = vld [vmem:[%s369 + $0x4] sm:$0xf]
      %v428 = vld [vmem:[%s369 + $0x8] sm:$0xf]
      %v429 = vld [vmem:[%s369 + $0xc] sm:$0xf]
      %v430 = vld [vmem:[%s369 + $0x10] sm:$0xf]
      %v431 = vld [vmem:[%s369 + $0x14] sm:$0xf]
      %v432 = vld [vmem:[%s369 + $0x18] sm:$0xf]
      %v433 = vld [vmem:[%s369 + $0x1c] sm:$0xf]
      %v434 = vld [vmem:[%s369 + $0x20] sm:$0xf]
      %v435 = vld [vmem:[%s369 + $0x24] sm:$0xf]
      %v436 = vld [vmem:[%s369 + $0x28] sm:$0xf]
      %v437 = vld [vmem:[%s369 + $0x2c] sm:$0xf]
      %v438 = vld [vmem:[%s369 + $0x30] sm:$0xf]
      %v439 = vld [vmem:[%s369 + $0x34] sm:$0xf]
      %v440 = vld [vmem:[%s369 + $0x38] sm:$0xf]
      %v441 = vld [vmem:[%s369 + $0x3c] sm:$0xf]
      %v442 = vld [vmem:[%s384] sm:$0xff]
      %v443 = vld [vmem:[%s384 + $0x8] sm:$0xff]
      %v444 = vld [vmem:[%s384 + $0x10] sm:$0xff]
      %v445 = vld [vmem:[%s384 + $0x18] sm:$0xff]
      %v446 = vld [vmem:[%s384 + $0x20] sm:$0xff]
      %v447 = vld [vmem:[%s384 + $0x28] sm:$0xff]
      %v448 = vld [vmem:[%s384 + $0x30] sm:$0xff]
      %v449 = vld [vmem:[%s384 + $0x38] sm:$0xff]
      %v450 = vld [vmem:[%s384 + $0x40] sm:$0xff]
      %v451 = vld [vmem:[%s384 + $0x48] sm:$0xff]
      %v452 = vld [vmem:[%s384 + $0x50] sm:$0xff]
      %v453 = vld [vmem:[%s384 + $0x58] sm:$0xff]
      %v454 = vld [vmem:[%s384 + $0x60] sm:$0xff]
      %v455 = vld [vmem:[%s384 + $0x68] sm:$0xff]
      %v456 = vld [vmem:[%s384 + $0x70] sm:$0xff]
      %v457 = vld [vmem:[%s384 + $0x78] sm:$0xff]
      %v458 = vld [vmem:[%s396] sm:$0xff]
      %v459 = vld [vmem:[%s396 + $0x8] sm:$0xff]
      %v460 = vld [vmem:[%s396 + $0x10] sm:$0xff]
      %v461 = vld [vmem:[%s396 + $0x18] sm:$0xff]
      %v462 = vld [vmem:[%s396 + $0x20] sm:$0xff]
      %v463 = vld [vmem:[%s396 + $0x28] sm:$0xff]
      %v464 = vld [vmem:[%s396 + $0x30] sm:$0xff]
      %v465 = vld [vmem:[%s396 + $0x38] sm:$0xff]
      %v466 = vld [vmem:[%s396 + $0x40] sm:$0xff]
      %v467 = vld [vmem:[%s396 + $0x48] sm:$0xff]
      %v468 = vld [vmem:[%s396 + $0x50] sm:$0xff]
      %v469 = vld [vmem:[%s396 + $0x58] sm:$0xff]
      %v470 = vld [vmem:[%s396 + $0x60] sm:$0xff]
      %v471 = vld [vmem:[%s396 + $0x68] sm:$0xff]
      %v472 = vld [vmem:[%s396 + $0x70] sm:$0xff]
      %v473 = vld [vmem:[%s396 + $0x78] sm:$0xff]
      %v474 = vld [vmem:[%s402] sm:$0xff]
      %v475 = vld [vmem:[%s402 + $0x8] sm:$0xff]
      %v476 = vld [vmem:[%s402 + $0x10] sm:$0xff]
      %v477 = vld [vmem:[%s402 + $0x18] sm:$0xff]
      %v478 = vld [vmem:[%s402 + $0x20] sm:$0xff]
      %v479 = vld [vmem:[%s402 + $0x28] sm:$0xff]
      %v480 = vld [vmem:[%s402 + $0x30] sm:$0xff]
      %v481 = vld [vmem:[%s402 + $0x38] sm:$0xff]
      %v482 = vld [vmem:[%s402 + $0x40] sm:$0xff]
      %v483 = vld [vmem:[%s402 + $0x48] sm:$0xff]
      %v484 = vld [vmem:[%s402 + $0x50] sm:$0xff]
      %v485 = vld [vmem:[%s402 + $0x58] sm:$0xff]
      %v486 = vld [vmem:[%s402 + $0x60] sm:$0xff]
      %v487 = vld [vmem:[%s402 + $0x68] sm:$0xff]
      %v488 = vld [vmem:[%s402 + $0x70] sm:$0xff]
      %v489 = vld [vmem:[%s402 + $0x78] sm:$0xff]
      %v490 = vld [vmem:[%s402 + $0x80] sm:$0xff]
      %v491 = vld [vmem:[%s402 + $0x88] sm:$0xff]
      %v492 = vld [vmem:[%s402 + $0x90] sm:$0xff]
      %v493 = vld [vmem:[%s402 + $0x98] sm:$0xff]
      %v494 = vld [vmem:[%s402 + $0xa0] sm:$0xff]
      %v495 = vld [vmem:[%s402 + $0xa8] sm:$0xff]
      %v496 = vld [vmem:[%s402 + $0xb0] sm:$0xff]
      %v497 = vld [vmem:[%s402 + $0xb8] sm:$0xff]
      %v498 = vld [vmem:[%s402 + $0xc0] sm:$0xff]
      %v499 = vld [vmem:[%s402 + $0xc8] sm:$0xff]
      %v500 = vld [vmem:[%s402 + $0xd0] sm:$0xff]
      %v501 = vld [vmem:[%s402 + $0xd8] sm:$0xff]
      %v502 = vld [vmem:[%s402 + $0xe0] sm:$0xff]
      %v503 = vld [vmem:[%s402 + $0xe8] sm:$0xff]
      %v504 = vld [vmem:[%s402 + $0xf0] sm:$0xff]
      %v505 = vld [vmem:[%s402 + $0xf8] sm:$0xff]
      %v522 = vunpack.c.l.b16 %v458
      %v523 = vunpack.c.h.b16 %v458
      %v524 = vunpack.c.l.b16 %v459
      %v525 = vunpack.c.h.b16 %v459
      %v526 = vunpack.c.l.b16 %v460
      %v527 = vunpack.c.h.b16 %v460
      %v528 = vunpack.c.l.b16 %v461
      %v529 = vunpack.c.h.b16 %v461
      %v530 = vunpack.c.l.b16 %v462
      %v531 = vunpack.c.h.b16 %v462
      %v532 = vunpack.c.l.b16 %v463
      %v533 = vunpack.c.h.b16 %v463
      %v534 = vunpack.c.l.b16 %v464
      %v535 = vunpack.c.h.b16 %v464
      %v536 = vunpack.c.l.b16 %v465
      %v537 = vunpack.c.h.b16 %v465
      %v538 = vunpack.c.l.b16 %v466
      %v539 = vunpack.c.h.b16 %v466
      %v540 = vunpack.c.l.b16 %v467
      %v541 = vunpack.c.h.b16 %v467
      %v542 = vunpack.c.l.b16 %v468
      %v543 = vunpack.c.h.b16 %v468
      %v544 = vunpack.c.l.b16 %v469
      %v545 = vunpack.c.h.b16 %v469
      %v546 = vunpack.c.l.b16 %v470
      %v547 = vunpack.c.h.b16 %v470
      %v548 = vunpack.c.l.b16 %v471
      %v549 = vunpack.c.h.b16 %v471
      %v550 = vunpack.c.l.b16 %v472
      %v551 = vunpack.c.h.b16 %v472
      %v552 = vunpack.c.l.b16 %v473
      %v553 = vunpack.c.h.b16 %v473
      %v554 = vpack.c.b16 %v524, %v522
      %v555 = vpack.c.b16 %v525, %v523
      %v556 = vpack.c.b16 %v528, %v526
      %v557 = vpack.c.b16 %v529, %v527
      %v558 = vpack.c.b16 %v532, %v530
      %v559 = vpack.c.b16 %v533, %v531
      %v560 = vpack.c.b16 %v536, %v534
      %v561 = vpack.c.b16 %v537, %v535
      %v562 = vpack.c.b16 %v540, %v538
      %v563 = vpack.c.b16 %v541, %v539
      %v564 = vpack.c.b16 %v544, %v542
      %v565 = vpack.c.b16 %v545, %v543
      %v566 = vpack.c.b16 %v548, %v546
      %v567 = vpack.c.b16 %v549, %v547
      %v568 = vpack.c.b16 %v552, %v550
      %v569 = vpack.c.b16 %v553, %v551
      %v618 = vunpack.c.l.b16 %v474
      %v619 = vunpack.c.h.b16 %v474
      %v620 = vunpack.c.l.b16 %v475
      %v621 = vunpack.c.h.b16 %v475
      %v622 = vunpack.c.l.b16 %v476
      %v623 = vunpack.c.h.b16 %v476
      %v624 = vunpack.c.l.b16 %v477
      %v625 = vunpack.c.h.b16 %v477
      %v626 = vunpack.c.l.b16 %v478
      %v627 = vunpack.c.h.b16 %v478
      %v628 = vunpack.c.l.b16 %v479
      %v629 = vunpack.c.h.b16 %v479
      %v630 = vunpack.c.l.b16 %v480
      %v631 = vunpack.c.h.b16 %v480
      %v632 = vunpack.c.l.b16 %v481
      %v633 = vunpack.c.h.b16 %v481
      %v634 = vunpack.c.l.b16 %v482
      %v635 = vunpack.c.h.b16 %v482
      %v636 = vunpack.c.l.b16 %v483
      %v637 = vunpack.c.h.b16 %v483
      %v638 = vunpack.c.l.b16 %v484
      %v639 = vunpack.c.h.b16 %v484
      %v640 = vunpack.c.l.b16 %v485
      %v641 = vunpack.c.h.b16 %v485
      %v642 = vunpack.c.l.b16 %v486
      %v643 = vunpack.c.h.b16 %v486
      %v644 = vunpack.c.l.b16 %v487
      %v645 = vunpack.c.h.b16 %v487
      %v646 = vunpack.c.l.b16 %v488
      %v647 = vunpack.c.h.b16 %v488
      %v648 = vunpack.c.l.b16 %v489
      %v649 = vunpack.c.h.b16 %v489
      %v650 = vunpack.c.l.b16 %v490
      %v651 = vunpack.c.h.b16 %v490
      %v652 = vunpack.c.l.b16 %v491
      %v653 = vunpack.c.h.b16 %v491
      %v654 = vunpack.c.l.b16 %v492
      %v655 = vunpack.c.h.b16 %v492
      %v656 = vunpack.c.l.b16 %v493
      %v657 = vunpack.c.h.b16 %v493
      %v658 = vunpack.c.l.b16 %v494
      %v659 = vunpack.c.h.b16 %v494
      %v660 = vunpack.c.l.b16 %v495
      %v661 = vunpack.c.h.b16 %v495
      %v662 = vunpack.c.l.b16 %v496
      %v663 = vunpack.c.h.b16 %v496
      %v664 = vunpack.c.l.b16 %v497
      %v665 = vunpack.c.h.b16 %v497
      %v666 = vunpack.c.l.b16 %v498
      %v667 = vunpack.c.h.b16 %v498
      %v668 = vunpack.c.l.b16 %v499
      %v669 = vunpack.c.h.b16 %v499
      %v670 = vunpack.c.l.b16 %v500
      %v671 = vunpack.c.h.b16 %v500
      %v672 = vunpack.c.l.b16 %v501
      %v673 = vunpack.c.h.b16 %v501
      %v674 = vunpack.c.l.b16 %v502
      %v675 = vunpack.c.h.b16 %v502
      %v676 = vunpack.c.l.b16 %v503
      %v677 = vunpack.c.h.b16 %v503
      %v678 = vunpack.c.l.b16 %v504
      %v679 = vunpack.c.h.b16 %v504
      %v680 = vunpack.c.l.b16 %v505
      %v681 = vunpack.c.h.b16 %v505
      %v682 = vpack.c.b16 %v620, %v618
      %v683 = vpack.c.b16 %v621, %v619
      %v684 = vpack.c.b16 %v624, %v622
      %v685 = vpack.c.b16 %v625, %v623
      %v686 = vpack.c.b16 %v628, %v626
      %v687 = vpack.c.b16 %v629, %v627
      %v688 = vpack.c.b16 %v632, %v630
      %v689 = vpack.c.b16 %v633, %v631
      %v690 = vpack.c.b16 %v636, %v634
      %v691 = vpack.c.b16 %v637, %v635
      %v692 = vpack.c.b16 %v640, %v638
      %v693 = vpack.c.b16 %v641, %v639
      %v694 = vpack.c.b16 %v644, %v642
      %v695 = vpack.c.b16 %v645, %v643
      %v696 = vpack.c.b16 %v648, %v646
      %v697 = vpack.c.b16 %v649, %v647
      %v698 = vpack.c.b16 %v652, %v650
      %v699 = vpack.c.b16 %v653, %v651
      %v700 = vpack.c.b16 %v656, %v654
      %v701 = vpack.c.b16 %v657, %v655
      %v702 = vpack.c.b16 %v660, %v658
      %v703 = vpack.c.b16 %v661, %v659
      %v704 = vpack.c.b16 %v664, %v662
      %v705 = vpack.c.b16 %v665, %v663
      %v706 = vpack.c.b16 %v668, %v666
      %v707 = vpack.c.b16 %v669, %v667
      %v708 = vpack.c.b16 %v672, %v670
      %v709 = vpack.c.b16 %v673, %v671
      %v710 = vpack.c.b16 %v676, %v674
      %v711 = vpack.c.b16 %v677, %v675
      %v712 = vpack.c.b16 %v680, %v678
      %v713 = vpack.c.b16 %v681, %v679
      %746 = vmatpush.bf16.msra.mxu0 %v696
      %747 = vmatpush.bf16.msra.mxu0 %v694
      %748 = vmatpush.bf16.msra.mxu0 %v692
      %749 = vmatpush.bf16.msra.mxu0 %v690
      %750 = vmatpush.bf16.msra.mxu0 %v688
      %751 = vmatpush.bf16.msra.mxu0 %v686
      %752 = vmatpush.bf16.msra.mxu0 %v684
      %753 = vmatpush.bf16.msra.mxu0 %v682
      %754 = vmatmul.bf16.gmra.mxu0 %v554
      %v755 = vpop.f32.mrf.mxu0
      %v756 = vadd.f32 0.0, %v755
      %v757 = vpop.f32.mrf.mxu0
      %v758 = vadd.f32 0.0, %v757
      %759 = vmatmul.bf16.gmra.mxu0 %v556
      %v760 = vpop.f32.mrf.mxu0
      %v761 = vadd.f32 0.0, %v760
      %v762 = vpop.f32.mrf.mxu0
      %v763 = vadd.f32 0.0, %v762
      %764 = vmatmul.bf16.gmra.mxu0 %v558
      %v765 = vpop.f32.mrf.mxu0
      %v766 = vadd.f32 0.0, %v765
      %v767 = vpop.f32.mrf.mxu0
      %v768 = vadd.f32 0.0, %v767
      %769 = vmatmul.bf16.gmra.mxu0 %v560
      %v770 = vpop.f32.mrf.mxu0
      %v771 = vadd.f32 0.0, %v770
      %v772 = vpop.f32.mrf.mxu0
      %v773 = vadd.f32 0.0, %v772
      %774 = vmatmul.bf16.gmra.mxu0 %v562
      %v775 = vpop.f32.mrf.mxu0
      %v776 = vadd.f32 0.0, %v775
      %v777 = vpop.f32.mrf.mxu0
      %v778 = vadd.f32 0.0, %v777
      %779 = vmatmul.bf16.gmra.mxu0 %v564
      %v780 = vpop.f32.mrf.mxu0
      %v781 = vadd.f32 0.0, %v780
      %v782 = vpop.f32.mrf.mxu0
      %v783 = vadd.f32 0.0, %v782
      %784 = vmatmul.bf16.gmra.mxu0 %v566
      %v785 = vpop.f32.mrf.mxu0
      %v786 = vadd.f32 0.0, %v785
      %v787 = vpop.f32.mrf.mxu0
      %v788 = vadd.f32 0.0, %v787
      %789 = vmatmul.bf16.gmra.mxu0 %v568
      %v790 = vpop.f32.mrf.mxu0
      %v791 = vadd.f32 0.0, %v790
      %v792 = vpop.f32.mrf.mxu0
      %v793 = vadd.f32 0.0, %v792
      %794 = vdwg.mxu0
      %795 = vmatpush.bf16.msra.mxu0 %v712
      %796 = vmatpush.bf16.msra.mxu0 %v710
      %797 = vmatpush.bf16.msra.mxu0 %v708
      %798 = vmatpush.bf16.msra.mxu0 %v706
      %799 = vmatpush.bf16.msra.mxu0 %v704
      %800 = vmatpush.bf16.msra.mxu0 %v702
      %801 = vmatpush.bf16.msra.mxu0 %v700
      %802 = vmatpush.bf16.msra.mxu0 %v698
      %803 = vmatmul.bf16.gmra.mxu0 %v555
      %v804 = vpop.f32.mrf.mxu0
      %v805 = vadd.f32 %v756, %v804
      %v806 = vpop.f32.mrf.mxu0
      %v807 = vadd.f32 %v758, %v806
      %808 = vmatmul.bf16.gmra.mxu0 %v557
      %v809 = vpop.f32.mrf.mxu0
      %v810 = vadd.f32 %v761, %v809
      %v811 = vpop.f32.mrf.mxu0
      %v812 = vadd.f32 %v763, %v811
      %813 = vmatmul.bf16.gmra.mxu0 %v559
      %v814 = vpop.f32.mrf.mxu0
      %v815 = vadd.f32 %v766, %v814
      %v816 = vpop.f32.mrf.mxu0
      %v817 = vadd.f32 %v768, %v816
      %818 = vmatmul.bf16.gmra.mxu0 %v561
      %v819 = vpop.f32.mrf.mxu0
      %v820 = vadd.f32 %v771, %v819
      %v821 = vpop.f32.mrf.mxu0
      %v822 = vadd.f32 %v773, %v821
      %823 = vmatmul.bf16.gmra.mxu0 %v563
      %v824 = vpop.f32.mrf.mxu0
      %v825 = vadd.f32 %v776, %v824
      %v826 = vpop.f32.mrf.mxu0
      %v827 = vadd.f32 %v778, %v826
      %828 = vmatmul.bf16.gmra.mxu0 %v565
      %v829 = vpop.f32.mrf.mxu0
      %v830 = vadd.f32 %v781, %v829
      %v831 = vpop.f32.mrf.mxu0
      %v832 = vadd.f32 %v783, %v831
      %833 = vmatmul.bf16.gmra.mxu0 %v567
      %v834 = vpop.f32.mrf.mxu0
      %v835 = vadd.f32 %v786, %v834
      %v836 = vpop.f32.mrf.mxu0
      %v837 = vadd.f32 %v788, %v836
      %838 = vmatmul.bf16.gmra.mxu0 %v569
      %v839 = vpop.f32.mrf.mxu0
      %v840 = vadd.f32 %v791, %v839
      %v841 = vpop.f32.mrf.mxu0
      %v842 = vadd.f32 %v793, %v841
      %843 = vdwg.mxu0
      %844 = vmatpush.bf16.msra.mxu0 %v697
      %845 = vmatpush.bf16.msra.mxu0 %v695
      %846 = vmatpush.bf16.msra.mxu0 %v693
      %847 = vmatpush.bf16.msra.mxu0 %v691
      %848 = vmatpush.bf16.msra.mxu0 %v689
      %849 = vmatpush.bf16.msra.mxu0 %v687
      %850 = vmatpush.bf16.msra.mxu0 %v685
      %851 = vmatpush.bf16.msra.mxu0 %v683
      %852 = vmatmul.bf16.gmra.mxu0 %v554
      %v853 = vpop.f32.mrf.mxu0
      %v854 = vadd.f32 0.0, %v853
      %v855 = vpop.f32.mrf.mxu0
      %v856 = vadd.f32 0.0, %v855
      %857 = vmatmul.bf16.gmra.mxu0 %v556
      %v858 = vpop.f32.mrf.mxu0
      %v859 = vadd.f32 0.0, %v858
      %v860 = vpop.f32.mrf.mxu0
      %v861 = vadd.f32 0.0, %v860
      %862 = vmatmul.bf16.gmra.mxu0 %v558
      %v863 = vpop.f32.mrf.mxu0
      %v864 = vadd.f32 0.0, %v863
      %v865 = vpop.f32.mrf.mxu0
      %v866 = vadd.f32 0.0, %v865
      %867 = vmatmul.bf16.gmra.mxu0 %v560
      %v868 = vpop.f32.mrf.mxu0
      %v869 = vadd.f32 0.0, %v868
      %v870 = vpop.f32.mrf.mxu0
      %v871 = vadd.f32 0.0, %v870
      %872 = vmatmul.bf16.gmra.mxu0 %v562
      %v873 = vpop.f32.mrf.mxu0
      %v874 = vadd.f32 0.0, %v873
      %v875 = vpop.f32.mrf.mxu0
      %v876 = vadd.f32 0.0, %v875
      %877 = vmatmul.bf16.gmra.mxu0 %v564
      %v878 = vpop.f32.mrf.mxu0
      %v879 = vadd.f32 0.0, %v878
      %v880 = vpop.f32.mrf.mxu0
      %v881 = vadd.f32 0.0, %v880
      %882 = vmatmul.bf16.gmra.mxu0 %v566
      %v883 = vpop.f32.mrf.mxu0
      %v884 = vadd.f32 0.0, %v883
      %v885 = vpop.f32.mrf.mxu0
      %v886 = vadd.f32 0.0, %v885
      %887 = vmatmul.bf16.gmra.mxu0 %v568
      %v888 = vpop.f32.mrf.mxu0
      %v889 = vadd.f32 0.0, %v888
      %v890 = vpop.f32.mrf.mxu0
      %v891 = vadd.f32 0.0, %v890
      %892 = vdwg.mxu0
      %893 = vmatpush.bf16.msra.mxu0 %v713
      %894 = vmatpush.bf16.msra.mxu0 %v711
      %895 = vmatpush.bf16.msra.mxu0 %v709
      %896 = vmatpush.bf16.msra.mxu0 %v707
      %897 = vmatpush.bf16.msra.mxu0 %v705
      %898 = vmatpush.bf16.msra.mxu0 %v703
      %899 = vmatpush.bf16.msra.mxu0 %v701
      %900 = vmatpush.bf16.msra.mxu0 %v699
      %901 = vmatmul.bf16.gmra.mxu0 %v555
      %v902 = vpop.f32.mrf.mxu0
      %v903 = vadd.f32 %v854, %v902
      %v904 = vpop.f32.mrf.mxu0
      %v905 = vadd.f32 %v856, %v904
      %906 = vmatmul.bf16.gmra.mxu0 %v557
      %v907 = vpop.f32.mrf.mxu0
      %v908 = vadd.f32 %v859, %v907
      %v909 = vpop.f32.mrf.mxu0
      %v910 = vadd.f32 %v861, %v909
      %911 = vmatmul.bf16.gmra.mxu0 %v559
      %v912 = vpop.f32.mrf.mxu0
      %v913 = vadd.f32 %v864, %v912
      %v914 = vpop.f32.mrf.mxu0
      %v915 = vadd.f32 %v866, %v914
      %916 = vmatmul.bf16.gmra.mxu0 %v561
      %v917 = vpop.f32.mrf.mxu0
      %v918 = vadd.f32 %v869, %v917
      %v919 = vpop.f32.mrf.mxu0
      %v920 = vadd.f32 %v871, %v919
      %921 = vmatmul.bf16.gmra.mxu0 %v563
      %v922 = vpop.f32.mrf.mxu0
      %v923 = vadd.f32 %v874, %v922
      %v924 = vpop.f32.mrf.mxu0
      %v925 = vadd.f32 %v876, %v924
      %926 = vmatmul.bf16.gmra.mxu0 %v565
      %v927 = vpop.f32.mrf.mxu0
      %v928 = vadd.f32 %v879, %v927
      %v929 = vpop.f32.mrf.mxu0
      %v930 = vadd.f32 %v881, %v929
      %931 = vmatmul.bf16.gmra.mxu0 %v567
      %v932 = vpop.f32.mrf.mxu0
      %v933 = vadd.f32 %v884, %v932
      %v934 = vpop.f32.mrf.mxu0
      %v935 = vadd.f32 %v886, %v934
      %936 = vmatmul.bf16.gmra.mxu0 %v569
      %v937 = vpop.f32.mrf.mxu0
      %v938 = vadd.f32 %v889, %v937
      %v939 = vpop.f32.mrf.mxu0
      %v940 = vadd.f32 %v891, %v939
      %941 = vdwg.mxu0
      %v958 = vunpack.c.l.b16 %v426
      %v959 = vunpack.c.l.b16 %v427
      %v960 = vunpack.c.l.b16 %v428
      %v961 = vunpack.c.l.b16 %v429
      %v962 = vunpack.c.l.b16 %v430
      %v963 = vunpack.c.l.b16 %v431
      %v964 = vunpack.c.l.b16 %v432
      %v965 = vunpack.c.l.b16 %v433
      %v966 = vunpack.c.l.b16 %v434
      %v967 = vunpack.c.l.b16 %v435
      %v968 = vunpack.c.l.b16 %v436
      %v969 = vunpack.c.l.b16 %v437
      %v970 = vunpack.c.l.b16 %v438
      %v971 = vunpack.c.l.b16 %v439
      %v972 = vunpack.c.l.b16 %v440
      %v973 = vunpack.c.l.b16 %v441
      %v974 = vpack.c.b16 %v959, %v958
      %v975 = vpack.c.b16 %v961, %v960
      %v976 = vpack.c.b16 %v963, %v962
      %v977 = vpack.c.b16 %v965, %v964
      %v978 = vpack.c.b16 %v967, %v966
      %v979 = vpack.c.b16 %v969, %v968
      %v980 = vpack.c.b16 %v971, %v970
      %v981 = vpack.c.b16 %v973, %v972
      %v1006 = vunpack.c.l.b16 %v442
      %v1007 = vunpack.c.h.b16 %v442
      %v1008 = vunpack.c.l.b16 %v443
      %v1009 = vunpack.c.h.b16 %v443
      %v1010 = vunpack.c.l.b16 %v444
      %v1011 = vunpack.c.h.b16 %v444
      %v1012 = vunpack.c.l.b16 %v445
      %v1013 = vunpack.c.h.b16 %v445
      %v1014 = vunpack.c.l.b16 %v446
      %v1015 = vunpack.c.h.b16 %v446
      %v1016 = vunpack.c.l.b16 %v447
      %v1017 = vunpack.c.h.b16 %v447
      %v1018 = vunpack.c.l.b16 %v448
      %v1019 = vunpack.c.h.b16 %v448
      %v1020 = vunpack.c.l.b16 %v449
      %v1021 = vunpack.c.h.b16 %v449
      %v1022 = vunpack.c.l.b16 %v450
      %v1023 = vunpack.c.h.b16 %v450
      %v1024 = vunpack.c.l.b16 %v451
      %v1025 = vunpack.c.h.b16 %v451
      %v1026 = vunpack.c.l.b16 %v452
      %v1027 = vunpack.c.h.b16 %v452
      %v1028 = vunpack.c.l.b16 %v453
      %v1029 = vunpack.c.h.b16 %v453
      %v1030 = vunpack.c.l.b16 %v454
      %v1031 = vunpack.c.h.b16 %v454
      %v1032 = vunpack.c.l.b16 %v455
      %v1033 = vunpack.c.h.b16 %v455
      %v1034 = vunpack.c.l.b16 %v456
      %v1035 = vunpack.c.h.b16 %v456
      %v1036 = vunpack.c.l.b16 %v457
      %v1037 = vunpack.c.h.b16 %v457
      %v1038 = vpack.c.b16 %v1008, %v1006
      %v1039 = vpack.c.b16 %v1009, %v1007
      %v1040 = vpack.c.b16 %v1012, %v1010
      %v1041 = vpack.c.b16 %v1013, %v1011
      %v1042 = vpack.c.b16 %v1016, %v1014
      %v1043 = vpack.c.b16 %v1017, %v1015
      %v1044 = vpack.c.b16 %v1020, %v1018
      %v1045 = vpack.c.b16 %v1021, %v1019
      %v1046 = vpack.c.b16 %v1024, %v1022
      %v1047 = vpack.c.b16 %v1025, %v1023
      %v1048 = vpack.c.b16 %v1028, %v1026
      %v1049 = vpack.c.b16 %v1029, %v1027
      %v1050 = vpack.c.b16 %v1032, %v1030
      %v1051 = vpack.c.b16 %v1033, %v1031
      %v1052 = vpack.c.b16 %v1036, %v1034
      %v1053 = vpack.c.b16 %v1037, %v1035
      %1070 = vmatpush.bf16.msra.mxu0 %v1052
      %1071 = vmatpush.bf16.msra.mxu0 %v1050
      %1072 = vmatpush.bf16.msra.mxu0 %v1048
      %1073 = vmatpush.bf16.msra.mxu0 %v1046
      %1074 = vmatpush.bf16.msra.mxu0 %v1044
      %1075 = vmatpush.bf16.msra.mxu0 %v1042
      %1076 = vmatpush.bf16.msra.mxu0 %v1040
      %1077 = vmatpush.bf16.msra.mxu0 %v1038
      %1078 = vmatmul.bf16.gmra.mxu0 %v974
      %v1079 = vpop.f32.mrf.mxu0
      %v1080 = vadd.f32 %v805, %v1079
      %v1081 = vpop.f32.mrf.mxu0
      %v1082 = vadd.f32 %v807, %v1081
      %1083 = vmatmul.bf16.gmra.mxu0 %v975
      %v1084 = vpop.f32.mrf.mxu0
      %v1085 = vadd.f32 %v810, %v1084
      %v1086 = vpop.f32.mrf.mxu0
      %v1087 = vadd.f32 %v812, %v1086
      %1088 = vmatmul.bf16.gmra.mxu0 %v976
      %v1089 = vpop.f32.mrf.mxu0
      %v1090 = vadd.f32 %v815, %v1089
      %v1091 = vpop.f32.mrf.mxu0
      %v1092 = vadd.f32 %v817, %v1091
      %1093 = vmatmul.bf16.gmra.mxu0 %v977
      %v1094 = vpop.f32.mrf.mxu0
      %v1095 = vadd.f32 %v820, %v1094
      %v1096 = vpop.f32.mrf.mxu0
      %v1097 = vadd.f32 %v822, %v1096
      %1098 = vmatmul.bf16.gmra.mxu0 %v978
      %v1099 = vpop.f32.mrf.mxu0
      %v1100 = vadd.f32 %v825, %v1099
      %v1101 = vpop.f32.mrf.mxu0
      %v1102 = vadd.f32 %v827, %v1101
      %1103 = vmatmul.bf16.gmra.mxu0 %v979
      %v1104 = vpop.f32.mrf.mxu0
      %v1105 = vadd.f32 %v830, %v1104
      %v1106 = vpop.f32.mrf.mxu0
      %v1107 = vadd.f32 %v832, %v1106
      %1108 = vmatmul.bf16.gmra.mxu0 %v980
      %v1109 = vpop.f32.mrf.mxu0
      %v1110 = vadd.f32 %v835, %v1109
      %v1111 = vpop.f32.mrf.mxu0
      %v1112 = vadd.f32 %v837, %v1111
      %1113 = vmatmul.bf16.gmra.mxu0 %v981
      %v1114 = vpop.f32.mrf.mxu0
      %v1115 = vadd.f32 %v840, %v1114
      %v1116 = vpop.f32.mrf.mxu0
      %v1117 = vadd.f32 %v842, %v1116
      %1118 = vdwg.mxu0
      %1119 = vmatpush.bf16.msra.mxu0 %v1053
      %1120 = vmatpush.bf16.msra.mxu0 %v1051
      %1121 = vmatpush.bf16.msra.mxu0 %v1049
      %1122 = vmatpush.bf16.msra.mxu0 %v1047
      %1123 = vmatpush.bf16.msra.mxu0 %v1045
      %1124 = vmatpush.bf16.msra.mxu0 %v1043
      %1125 = vmatpush.bf16.msra.mxu0 %v1041
      %1126 = vmatpush.bf16.msra.mxu0 %v1039
      %1127 = vmatmul.bf16.gmra.mxu0 %v974
      %v1128 = vpop.f32.mrf.mxu0
      %v1129 = vadd.f32 %v903, %v1128
      %v1130 = vpop.f32.mrf.mxu0
      %v1131 = vadd.f32 %v905, %v1130
      %1132 = vmatmul.bf16.gmra.mxu0 %v975
      %v1133 = vpop.f32.mrf.mxu0
      %v1134 = vadd.f32 %v908, %v1133
      %v1135 = vpop.f32.mrf.mxu0
      %v1136 = vadd.f32 %v910, %v1135
      %1137 = vmatmul.bf16.gmra.mxu0 %v976
      %v1138 = vpop.f32.mrf.mxu0
      %v1139 = vadd.f32 %v913, %v1138
      %v1140 = vpop.f32.mrf.mxu0
      %v1141 = vadd.f32 %v915, %v1140
      %1142 = vmatmul.bf16.gmra.mxu0 %v977
      %v1143 = vpop.f32.mrf.mxu0
      %v1144 = vadd.f32 %v918, %v1143
      %v1145 = vpop.f32.mrf.mxu0
      %v1146 = vadd.f32 %v920, %v1145
      %1147 = vmatmul.bf16.gmra.mxu0 %v978
      %v1148 = vpop.f32.mrf.mxu0
      %v1149 = vadd.f32 %v923, %v1148
      %v1150 = vpop.f32.mrf.mxu0
      %v1151 = vadd.f32 %v925, %v1150
      %1152 = vmatmul.bf16.gmra.mxu0 %v979
      %v1153 = vpop.f32.mrf.mxu0
      %v1154 = vadd.f32 %v928, %v1153
      %v1155 = vpop.f32.mrf.mxu0
      %v1156 = vadd.f32 %v930, %v1155
      %1157 = vmatmul.bf16.gmra.mxu0 %v980
      %v1158 = vpop.f32.mrf.mxu0
      %v1159 = vadd.f32 %v933, %v1158
      %v1160 = vpop.f32.mrf.mxu0
      %v1161 = vadd.f32 %v935, %v1160
      %1162 = vmatmul.bf16.gmra.mxu0 %v981
      %v1163 = vpop.f32.mrf.mxu0
      %v1164 = vadd.f32 %v938, %v1163
      %v1165 = vpop.f32.mrf.mxu0
      %v1166 = vadd.f32 %v940, %v1165
      %1167 = vdwg.mxu0
      %v1168 = vld [vmem:[%s408] sm:$0xff]
      %v1169 = vld [vmem:[%s408 + $0x8] sm:$0xff]
      %v1170 = vld [vmem:[%s408 + $0x10] sm:$0xff]
      %v1171 = vld [vmem:[%s408 + $0x18] sm:$0xff]
      %v1172 = vld [vmem:[%s408 + $0x20] sm:$0xff]
      %v1173 = vld [vmem:[%s408 + $0x28] sm:$0xff]
      %v1174 = vld [vmem:[%s408 + $0x30] sm:$0xff]
      %v1175 = vld [vmem:[%s408 + $0x38] sm:$0xff]
      %v1176 = vld [vmem:[%s408 + $0x40] sm:$0xff]
      %v1177 = vld [vmem:[%s408 + $0x48] sm:$0xff]
      %v1178 = vld [vmem:[%s408 + $0x50] sm:$0xff]
      %v1179 = vld [vmem:[%s408 + $0x58] sm:$0xff]
      %v1180 = vld [vmem:[%s408 + $0x60] sm:$0xff]
      %v1181 = vld [vmem:[%s408 + $0x68] sm:$0xff]
      %v1182 = vld [vmem:[%s408 + $0x70] sm:$0xff]
      %v1183 = vld [vmem:[%s408 + $0x78] sm:$0xff]
      %1185 = vset.pattern.permute.xlu0 0
      %1186 = vperm.xlu0 %1185, %v1168
      %v1187 = vpop.permute.xlu0 %1186
      %1190 = vset.pattern.permute.xlu0 0
      %1191 = vperm.xlu0 %1190, %v1169
      %v1192 = vpop.permute.xlu0 %1191
      %1195 = vset.pattern.permute.xlu0 0
      %1196 = vperm.xlu0 %1195, %v1170
      %v1197 = vpop.permute.xlu0 %1196
      %1200 = vset.pattern.permute.xlu0 0
      %1201 = vperm.xlu0 %1200, %v1171
      %v1202 = vpop.permute.xlu0 %1201
      %1205 = vset.pattern.permute.xlu0 0
      %1206 = vperm.xlu0 %1205, %v1172
      %v1207 = vpop.permute.xlu0 %1206
      %1210 = vset.pattern.permute.xlu0 0
      %1211 = vperm.xlu0 %1210, %v1173
      %v1212 = vpop.permute.xlu0 %1211
      %1215 = vset.pattern.permute.xlu0 0
      %1216 = vperm.xlu0 %1215, %v1174
      %v1217 = vpop.permute.xlu0 %1216
      %1220 = vset.pattern.permute.xlu0 0
      %1221 = vperm.xlu0 %1220, %v1175
      %v1222 = vpop.permute.xlu0 %1221
      %1225 = vset.pattern.permute.xlu0 0
      %1226 = vperm.xlu0 %1225, %v1176
      %v1227 = vpop.permute.xlu0 %1226
      %1230 = vset.pattern.permute.xlu0 0
      %1231 = vperm.xlu0 %1230, %v1177
      %v1232 = vpop.permute.xlu0 %1231
      %1235 = vset.pattern.permute.xlu0 0
      %1236 = vperm.xlu0 %1235, %v1178
      %v1237 = vpop.permute.xlu0 %1236
      %1240 = vset.pattern.permute.xlu0 0
      %1241 = vperm.xlu0 %1240, %v1179
      %v1242 = vpop.permute.xlu0 %1241
      %1245 = vset.pattern.permute.xlu0 0
      %1246 = vperm.xlu0 %1245, %v1180
      %v1247 = vpop.permute.xlu0 %1246
      %1250 = vset.pattern.permute.xlu0 0
      %1251 = vperm.xlu0 %1250, %v1181
      %v1252 = vpop.permute.xlu0 %1251
      %1255 = vset.pattern.permute.xlu0 0
      %1256 = vperm.xlu0 %1255, %v1182
      %v1257 = vpop.permute.xlu0 %1256
      %1260 = vset.pattern.permute.xlu0 0
      %1261 = vperm.xlu0 %1260, %v1183
      %v1262 = vpop.permute.xlu0 %1261
      %v1264 = vadd.f32 %v1080, %v1187
      %v1265 = vadd.f32 %v1129, %v1187
      %v1266 = vadd.f32 %v1082, %v1192
      %v1267 = vadd.f32 %v1131, %v1192
      %v1268 = vadd.f32 %v1085, %v1197
      %v1269 = vadd.f32 %v1134, %v1197
      %v1270 = vadd.f32 %v1087, %v1202
      %v1271 = vadd.f32 %v1136, %v1202
      %v1272 = vadd.f32 %v1090, %v1207
      %v1273 = vadd.f32 %v1139, %v1207
      %v1274 = vadd.f32 %v1092, %v1212
      %v1275 = vadd.f32 %v1141, %v1212
      %v1276 = vadd.f32 %v1095, %v1217
      %v1277 = vadd.f32 %v1144, %v1217
      %v1278 = vadd.f32 %v1097, %v1222
      %v1279 = vadd.f32 %v1146, %v1222
      %v1280 = vadd.f32 %v1100, %v1227
      %v1281 = vadd.f32 %v1149, %v1227
      %v1282 = vadd.f32 %v1102, %v1232
      %v1283 = vadd.f32 %v1151, %v1232
      %v1284 = vadd.f32 %v1105, %v1237
      %v1285 = vadd.f32 %v1154, %v1237
      %v1286 = vadd.f32 %v1107, %v1242
      %v1287 = vadd.f32 %v1156, %v1242
      %v1288 = vadd.f32 %v1110, %v1247
      %v1289 = vadd.f32 %v1159, %v1247
      %v1290 = vadd.f32 %v1112, %v1252
      %v1291 = vadd.f32 %v1161, %v1252
      %v1292 = vadd.f32 %v1115, %v1257
      %v1293 = vadd.f32 %v1164, %v1257
      %v1294 = vadd.f32 %v1117, %v1262
      %v1295 = vadd.f32 %v1166, %v1262
      %v1296 = vmax.f32 %v1264, 0.0
      %v1297 = vmax.f32 %v1265, 0.0
      %v1298 = vmax.f32 %v1266, 0.0
      %v1299 = vmax.f32 %v1267, 0.0
      %v1300 = vmax.f32 %v1268, 0.0
      %v1301 = vmax.f32 %v1269, 0.0
      %v1302 = vmax.f32 %v1270, 0.0
      %v1303 = vmax.f32 %v1271, 0.0
      %v1304 = vmax.f32 %v1272, 0.0
      %v1305 = vmax.f32 %v1273, 0.0
      %v1306 = vmax.f32 %v1274, 0.0
      %v1307 = vmax.f32 %v1275, 0.0
      %v1308 = vmax.f32 %v1276, 0.0
      %v1309 = vmax.f32 %v1277, 0.0
      %v1310 = vmax.f32 %v1278, 0.0
      %v1311 = vmax.f32 %v1279, 0.0
      %v1312 = vmax.f32 %v1280, 0.0
      %v1313 = vmax.f32 %v1281, 0.0
      %v1314 = vmax.f32 %v1282, 0.0
      %v1315 = vmax.f32 %v1283, 0.0
      %v1316 = vmax.f32 %v1284, 0.0
      %v1317 = vmax.f32 %v1285, 0.0
      %v1318 = vmax.f32 %v1286, 0.0
      %v1319 = vmax.f32 %v1287, 0.0
      %v1320 = vmax.f32 %v1288, 0.0
      %v1321 = vmax.f32 %v1289, 0.0
      %v1322 = vmax.f32 %v1290, 0.0
      %v1323 = vmax.f32 %v1291, 0.0
      %v1324 = vmax.f32 %v1292, 0.0
      %v1325 = vmax.f32 %v1293, 0.0
      %v1326 = vmax.f32 %v1294, 0.0
      %v1327 = vmax.f32 %v1295, 0.0
      %1328 = vst [vmem:[%s423] sm:$0xff] %v1296
      %1329 = vst [vmem:[%s423 + $0x8] sm:$0xff] %v1297
      %1330 = vst [vmem:[%s423 + $0x10] sm:$0xff] %v1298
      %1331 = vst [vmem:[%s423 + $0x18] sm:$0xff] %v1299
      %1332 = vst [vmem:[%s423 + $0x20] sm:$0xff] %v1300
      %1333 = vst [vmem:[%s423 + $0x28] sm:$0xff] %v1301
      %1334 = vst [vmem:[%s423 + $0x30] sm:$0xff] %v1302
      %1335 = vst [vmem:[%s423 + $0x38] sm:$0xff] %v1303
      %1336 = vst [vmem:[%s423 + $0x40] sm:$0xff] %v1304
      %1337 = vst [vmem:[%s423 + $0x48] sm:$0xff] %v1305
      %1338 = vst [vmem:[%s423 + $0x50] sm:$0xff] %v1306
      %1339 = vst [vmem:[%s423 + $0x58] sm:$0xff] %v1307
      %1340 = vst [vmem:[%s423 + $0x60] sm:$0xff] %v1308
      %1341 = vst [vmem:[%s423 + $0x68] sm:$0xff] %v1309
      %1342 = vst [vmem:[%s423 + $0x70] sm:$0xff] %v1310
      %1343 = vst [vmem:[%s423 + $0x78] sm:$0xff] %v1311
      %1344 = vst [vmem:[%s423 + $0x80] sm:$0xff] %v1312
      %1345 = vst [vmem:[%s423 + $0x88] sm:$0xff] %v1313
      %1346 = vst [vmem:[%s423 + $0x90] sm:$0xff] %v1314
      %1347 = vst [vmem:[%s423 + $0x98] sm:$0xff] %v1315
      %1348 = vst [vmem:[%s423 + $0xa0] sm:$0xff] %v1316
      %1349 = vst [vmem:[%s423 + $0xa8] sm:$0xff] %v1317
      %1350 = vst [vmem:[%s423 + $0xb0] sm:$0xff] %v1318
      %1351 = vst [vmem:[%s423 + $0xb8] sm:$0xff] %v1319
      %1352 = vst [vmem:[%s423 + $0xc0] sm:$0xff] %v1320
      %1353 = vst [vmem:[%s423 + $0xc8] sm:$0xff] %v1321
      %1354 = vst [vmem:[%s423 + $0xd0] sm:$0xff] %v1322
      %1355 = vst [vmem:[%s423 + $0xd8] sm:$0xff] %v1323
      %1356 = vst [vmem:[%s423 + $0xe0] sm:$0xff] %v1324
      %1357 = vst [vmem:[%s423 + $0xe8] sm:$0xff] %v1325
      %1358 = vst [vmem:[%s423 + $0xf0] sm:$0xff] %v1326
      %1359 = vst [vmem:[%s423 + $0xf8] sm:$0xff] %v1327
      %s1360 = smul.u32 16, %s23
      %s1361 = smul.u32 2, %s24
      %p1362 = scmp.lt.s32.totalorder %s22, 1
      %s1363 = scalar_select %p1362, %s22, 1
      %p1364 = scmp.lt.s32.totalorder %s1360, 15
      %s1365 = scalar_select %p1364, %s1360, 15
      %p1366 = scmp.lt.s32.totalorder %s1361, 1
      %s1367 = scalar_select %p1366, %s1361, 1
      %s1368 = smul.addr %s1365, 2
      %s1369 = sadd.s32 %s1367, %s1368
      %s1370 = smul.addr %s1363, 32
      %s1371 = sadd.s32 %s1369, %s1370
      %s1372 = smul.addr %s1371, 8
      %s1373 = scalar_lea.vmem %s5, %s1372
      // Predicated region
      $region41: #{psp_forward.5} parent=39 // pred_check
        %p1374 = pneg %p202
      $region42: #{psp_forward.5} parent=39 // pred_check_branch
        %1376 = sbr.rel (%p1374) target = $region44
      $region43: #{psp_forward.5} parent=39 // pred_region
        %s1377 = smul.u32 16, %s23
        %s1378 = smul.u32 2, %s24
      $region44: #{psp_forward.5} parent=39 // pred_fallthru
        _
    $region40: #{psp_forward.5} parent=5 // pred_fallthru
      _
    %p1379 = scmp.le.s32.totalorder 2, %s11
    // Predicated region
    $region45: #{psp_forward.5} parent=5 // pred_check
      %p1380 = pneg %p1379
    $region46: #{psp_forward.5} parent=5 // pred_check_branch
      %1382 = sbr.rel (%p1380) target = $region48
    $region47: #{psp_forward.5} parent=5 // pred_region
      %s1383 = ssub.s32 %s11, 2
      // Predicated region
      $region49: #{psp_forward.5} parent=47 // pred_check
        %p1384 = pneg %p208
      $region50: #{psp_forward.5} parent=47 // pred_check_branch
        %1386 = sbr.rel (%p1384) target = $region52
      $region51: #{psp_forward.5} parent=47 // pred_region
        %s1387 = smul.u32 16, %s27
        %s1388 = smul.u32 2, %s28
        %p1389 = scmp.lt.s32.totalorder %s26, 1
        %s1390 = scalar_select %p1389, %s26, 1
        %p1391 = scmp.lt.s32.totalorder %s1387, 15
        %s1392 = scalar_select %p1391, %s1387, 15
        %p1393 = scmp.lt.s32.totalorder %s1388, 1
        %s1394 = scalar_select %p1393, %s1388, 1
        %s1395 = smul.addr %s1392, 2
        %s1396 = sadd.s32 %s1394, %s1395
        %s1397 = smul.addr %s1390, 32
        %s1398 = sadd.s32 %s1396, %s1397
        %s1399 = smul.addr %s1398, 8
        %s1400 = scalar_lea.vmem %s5, %s1399
      $region52: #{psp_forward.5} parent=47 // pred_fallthru
        _
    $region48: #{psp_forward.5} parent=5 // pred_fallthru
      _
  $region6: #{psp_forward.5} parent=0 // loop_footer
    %s15 = sadd.s32 1, %s11
  $region7: #{psp_forward.5} parent=0 // loop_footer_branch
    %10 = sbr.rel target = $region3
  $region8: #{psp_forward.5} parent=0 // loop_exit
    _

</llo_original>
